<compile_context>
chip_gen: v6e
topology: v6e:2x2x1
jax: 0.10.0
libtpu: 0.0.40
codegen_flags: <defaults>
</compile_context>

<pallas_src>
import functools
import math

import jax
import jax.numpy as jnp
from jax.experimental import pallas as pl
from jax.experimental.pallas import tpu as pltpu


# -----------------------------------------------------------------------------
# Kernel: one batch tile of the whole decoder (Linear -> ReLU -> Linear -> Sigmoid)
# -----------------------------------------------------------------------------
def decoder_kernel(w_ref, w0_ref, b0_ref, w1_ref, b1_ref, o_ref):
    # layer 0: Linear(latent -> hidden) + ReLU   (dropout = identity, eval mode)
    # TODO(synk): training-mode stochastic dropout would need pltpu.prng_seed /
    # pltpu.prng_random_bits inside the kernel.
    h = jnp.dot(w_ref[...], w0_ref[...], preferred_element_type=jnp.float32)
    h = jnp.maximum(h + b0_ref[...], 0.0)                  # hidden_activation = ReLU
    # final layer: Linear(hidden -> input_size) + Sigmoid
    y = jnp.dot(h, w1_ref[...], preferred_element_type=jnp.float32) + b1_ref[...]
    # sigmoid(y) == 0.5*tanh(0.5*y) + 0.5 exactly; tanh lowers to the EUP slot,
    # keeping VALU / vst slots free for the store-bound epilogue.
    o_ref[...] = (0.5 * jnp.tanh(0.5 * y) + 0.5).astype(o_ref.dtype)


# -----------------------------------------------------------------------------
# One-time parameter preparation (hoisted out of the per-call path).
# -----------------------------------------------------------------------------
def _choose_fold(latent, hidden, out_dim, max_weight_bytes=8 << 20):
    """Smallest fold making both latent*fold and out_dim*fold multiples of 128."""
    def lane_fold(d):
        return 128 // math.gcd(128, d)

    f_out = lane_fold(out_dim)
    f_in = lane_fold(latent)
    fold = (f_out * f_in) // math.gcd(f_out, f_in)        # lcm -> fully lane-dense

    def weight_bytes(f):
        return 4 * f * f * (latent * hidden + hidden * out_dim)

    if weight_bytes(fold) > max_weight_bytes:
        fold = f_out                                       # at least lane-dense output
    if weight_bytes(fold) > max_weight_bytes:
        # Fallback: masked (vst.msk) stores, correct but ~4x slower writeback.
        fold = 1
    return fold


def fold_decoder_params(W0, b0, W1, b1):
    """Build block-diagonal folded weights once so every in-kernel load/store is
    a full 128-lane access.  Call once, reuse the result across forward calls."""
    latent, hidden = W0.shape
    out_dim = W1.shape[1]
    fold = _choose_fold(latent, hidden, out_dim)

    eye = jnp.eye(fold, dtype=W0.dtype)
    W0f = jnp.kron(eye, W0)                                # (latent*fold, hidden*fold)
    W1f = jnp.kron(eye, W1)                                # (hidden*fold, out_dim*fold)
    b0f = jnp.tile(jnp.reshape(b0, (1, hidden)), (1, fold))
    b1f = jnp.tile(jnp.reshape(b1, (1, out_dim)), (1, fold))
    return dict(W0f=W0f, b0f=b0f, W1f=W1f, b1f=b1f,
                fold=fold, latent=latent, hidden=hidden, out_dim=out_dim)


# -----------------------------------------------------------------------------
# Jitted per-call path: tiny pad -> fold reshape -> pallas_call -> unfold.
# -----------------------------------------------------------------------------
@functools.partial(
    jax.jit,
    static_argnames=("fold", "latent", "out_dim", "batch_tile", "out_dtype"))
def _decoder_apply(w, W0f, b0f, W1f, b1f, *, fold, latent, out_dim,
                   batch_tile, out_dtype):
    B = w.shape[0]
    # Pad only up to a multiple of `fold` (a handful of rows) - no full-tile pad.
    B_pad = -(-B // fold) * fold
    if B_pad != B:
        w = jnp.pad(w, ((0, B_pad - B), (0, 0)))
    folded_rows = B_pad // fold
    wf = w.reshape(folded_rows, latent * fold)             # pure row-major reshape

    lat_f = latent * fold
    hid_f = W0f.shape[1]
    out_f = out_dim * fold

    bt = max(8, (batch_tile // 8) * 8)                     # folded rows per grid step
    if folded_rows <= bt:
        bt = folded_rows                                   # full-extent block is legal
    grid = (pl.cdiv(folded_rows, bt),)                     # partial last block is fine

    folded_out = pl.pallas_call(
        decoder_kernel,
        out_shape=jax.ShapeDtypeStruct((folded_rows, out_f), out_dtype),
        grid_spec=pltpu.PrefetchScalarGridSpec(
            num_scalar_prefetch=0,
            grid=grid,
            in_specs=[
                pl.BlockSpec((bt, lat_f), lambda i: (i, 0)),     # streamed input
                pl.BlockSpec((lat_f, hid_f), lambda i: (0, 0)),  # resident W0f
                pl.BlockSpec((1, hid_f), lambda i: (0, 0)),      # resident b0f
                pl.BlockSpec((hid_f, out_f), lambda i: (0, 0)),  # resident W1f
                pl.BlockSpec((1, out_f), lambda i: (0, 0)),      # resident b1f
            ],
            out_specs=pl.BlockSpec((bt, out_f), lambda i: (i, 0)),
        ),
        compiler_params=pltpu.CompilerParams(
            dimension_semantics=("parallel",)),
    )(wf, W0f, b0f, W1f, b1f)

    return folded_out.reshape(B_pad, out_dim)[:B]


def decoder_forward(w, params, *, batch_tile=512, out_dtype=jnp.float32):
    """w: (B, latent) f32.  `params` comes from fold_decoder_params()."""
    return _decoder_apply(
        w, params["W0f"], params["b0f"], params["W1f"], params["b1f"],
        fold=params["fold"], latent=params["latent"], out_dim=params["out_dim"],
        batch_tile=batch_tile, out_dtype=out_dtype)


def reference_forward(w, W0, b0, W1, b1):
    h = jnp.maximum(w @ W0 + b0, 0.0)
    return jax.nn.sigmoid(h @ W1 + b1)


if __name__ == "__main__":
    input_size = 64
    hidden_neurons = [64, 32, 8, 32]
    latent = hidden_neurons[len(hidden_neurons) // 2]      # 8
    hidden = hidden_neurons[-1]                            # 32
    B = 200   # small; deliberately NOT a multiple of the fold factor (pad path)

    key = jax.random.PRNGKey(0)
    k_in, k_w0, k_b0, k_w1, k_b1 = jax.random.split(key, 5)

    # PyTorch Linear stores weights as (out, in); transpose to (in, out).
    W0_pt = jax.random.normal(k_w0, (hidden, latent), jnp.float32) * 0.1
    b0_pt = jax.random.normal(k_b0, (hidden,), jnp.float32) * 0.1
    W1_pt = jax.random.normal(k_w1, (input_size, hidden), jnp.float32) * 0.1
    b1_pt = jax.random.normal(k_b1, (input_size,), jnp.float32) * 0.1

    W0 = W0_pt.T                       # (latent, hidden)
    b0 = b0_pt                         # (hidden,)
    W1 = W1_pt.T                       # (hidden, input_size)
    b1 = b1_pt                         # (input_size,)

    w = jax.random.normal(k_in, (B, latent), jnp.float32)

    params = fold_decoder_params(W0, b0, W1, b1)           # one-time weight prep
    out = decoder_forward(w, params)
    out = jax.block_until_ready(out)

    ref = reference_forward(w, W0, b0.reshape(1, -1), W1, b1.reshape(1, -1))
    assert out.shape == (B, input_size)
    assert jnp.allclose(out, ref, atol=1e-5, rtol=1e-5)

    print("KERNEL_OK")
</pallas_src>

<mosaic_0001>
module attributes {stable_mosaic.version = 11 : i64} {
  func.func @decoder_kernel(%arg0: i32, %arg1: memref<13x128xf32, #tpu.memory_space<vmem>>, %arg2: memref<128x512xf32, #tpu.memory_space<vmem>>, %arg3: memref<1x512xf32, #tpu.memory_space<vmem>>, %arg4: memref<512x1024xf32, #tpu.memory_space<vmem>>, %arg5: memref<1x1024xf32, #tpu.memory_space<vmem>>, %arg6: memref<13x1024xf32, #tpu.memory_space<vmem>>) attributes {dimension_semantics = [#tpu.dimension_semantics<parallel>], iteration_bounds = array<i64: 1>, scalar_prefetch = 0 : i64, scratch_operands = 0 : i64, tpu.core_type = #tpu.core_type<tc>, window_params = [{transform_indices = @transform_0, window_bounds = array<i64: 13, 128>}, {pipeline_mode = #tpu.pipeline_mode<synchronous>, transform_indices = @transform_1, window_bounds = array<i64: 128, 512>}, {pipeline_mode = #tpu.pipeline_mode<synchronous>, transform_indices = @transform_2, window_bounds = array<i64: 1, 512>}, {pipeline_mode = #tpu.pipeline_mode<synchronous>, transform_indices = @transform_3, window_bounds = array<i64: 512, 1024>}, {pipeline_mode = #tpu.pipeline_mode<synchronous>, transform_indices = @transform_4, window_bounds = array<i64: 1, 1024>}, {transform_indices = @transform_5, window_bounds = array<i64: 13, 1024>}]} {
    %c0 = arith.constant 0 : index
    %c0_0 = arith.constant 0 : index
    %0 = vector.load %arg1[%c0, %c0_0] : memref<13x128xf32, #tpu.memory_space<vmem>>, vector<13x128xf32>
    %c0_1 = arith.constant 0 : index
    %c0_2 = arith.constant 0 : index
    %1 = vector.load %arg2[%c0_1, %c0_2] : memref<128x512xf32, #tpu.memory_space<vmem>>, vector<128x512xf32>
    %cst = arith.constant dense<0.000000e+00> : vector<13x512xf32>
    %2 = tpu.matmul %0, %1, %cst {dimension_numbers = #tpu.dot_dimension_numbers<[1], [0], [0], [1], [0, 0, 1, 1], [], []>} : vector<13x128xf32>, vector<128x512xf32>, vector<13x512xf32> -> vector<13x512xf32>
    %c0_3 = arith.constant 0 : index
    %c0_4 = arith.constant 0 : index
    %3 = vector.load %arg3[%c0_3, %c0_4] : memref<1x512xf32, #tpu.memory_space<vmem>>, vector<1x512xf32>
    %4 = vector.broadcast %3 : vector<1x512xf32> to vector<13x512xf32>
    %5 = arith.addf %2, %4 : vector<13x512xf32>
    %cst_5 = arith.constant 0.000000e+00 : f32
    %6 = vector.broadcast %cst_5 : f32 to vector<13x512xf32>
    %7 = arith.maximumf %5, %6 : vector<13x512xf32>
    %c0_6 = arith.constant 0 : index
    %c0_7 = arith.constant 0 : index
    %8 = vector.load %arg4[%c0_6, %c0_7] : memref<512x1024xf32, #tpu.memory_space<vmem>>, vector<512x1024xf32>
    %cst_8 = arith.constant dense<0.000000e+00> : vector<13x1024xf32>
    %9 = tpu.matmul %7, %8, %cst_8 {dimension_numbers = #tpu.dot_dimension_numbers<[1], [0], [0], [1], [0, 0, 1, 1], [], []>} : vector<13x512xf32>, vector<512x1024xf32>, vector<13x1024xf32> -> vector<13x1024xf32>
    %c0_9 = arith.constant 0 : index
    %c0_10 = arith.constant 0 : index
    %10 = vector.load %arg5[%c0_9, %c0_10] : memref<1x1024xf32, #tpu.memory_space<vmem>>, vector<1x1024xf32>
    %11 = vector.broadcast %10 : vector<1x1024xf32> to vector<13x1024xf32>
    %12 = arith.addf %9, %11 : vector<13x1024xf32>
    %cst_11 = arith.constant 5.000000e-01 : f32
    %13 = vector.broadcast %cst_11 : f32 to vector<13x1024xf32>
    %14 = arith.mulf %13, %12 : vector<13x1024xf32>
    %15 = math.tanh %14 : vector<13x1024xf32>
    %cst_12 = arith.constant 5.000000e-01 : f32
    %16 = vector.broadcast %cst_12 : f32 to vector<13x1024xf32>
    %17 = arith.mulf %16, %15 : vector<13x1024xf32>
    %cst_13 = arith.constant 5.000000e-01 : f32
    %18 = vector.broadcast %cst_13 : f32 to vector<13x1024xf32>
    %19 = arith.addf %17, %18 : vector<13x1024xf32>
    %c0_14 = arith.constant 0 : index
    %c0_15 = arith.constant 0 : index
    %20 = vector.load %arg6[%c0_14, %c0_15] : memref<13x1024xf32, #tpu.memory_space<vmem>>, vector<13x1024xf32>
    tpu.vector_store %arg6[%c0_14, %c0_15], %19 {strides = array<i32>} : memref<13x1024xf32, #tpu.memory_space<vmem>>, vector<13x1024xf32>,
    return
  }
  func.func @transform_0(%arg0: i32) -> (i32, i32) {
    %c0_i32 = arith.constant 0 : i32
    %c0_i32_0 = arith.constant 0 : i32
    return %arg0, %c0_i32 : i32, i32
  }
  func.func @transform_1(%arg0: i32) -> (i32, i32) {
    %c0_i32 = arith.constant 0 : i32
    %c0_i32_0 = arith.constant 0 : i32
    %c0_i32_1 = arith.constant 0 : i32
    return %c0_i32, %c0_i32_0 : i32, i32
  }
  func.func @transform_2(%arg0: i32) -> (i32, i32) {
    %c0_i32 = arith.constant 0 : i32
    %c0_i32_0 = arith.constant 0 : i32
    %c0_i32_1 = arith.constant 0 : i32
    return %c0_i32, %c0_i32_0 : i32, i32
  }
  func.func @transform_3(%arg0: i32) -> (i32, i32) {
    %c0_i32 = arith.constant 0 : i32
    %c0_i32_0 = arith.constant 0 : i32
    %c0_i32_1 = arith.constant 0 : i32
    return %c0_i32, %c0_i32_0 : i32, i32
  }
  func.func @transform_4(%arg0: i32) -> (i32, i32) {
    %c0_i32 = arith.constant 0 : i32
    %c0_i32_0 = arith.constant 0 : i32
    %c0_i32_1 = arith.constant 0 : i32
    return %c0_i32, %c0_i32_0 : i32, i32
  }
  func.func @transform_5(%arg0: i32) -> (i32, i32) {
    %c0_i32 = arith.constant 0 : i32
    %c0_i32_0 = arith.constant 0 : i32
    return %arg0, %c0_i32 : i32, i32
  }
}

</mosaic_0001>

<llo_original>
// kernel: _decoder_apply.1
$region0: #{_decoder_apply.1}
  #allocation0 [shape = 'u32[]', space=smem, size = 0x4, offset = 0x4, fixed_abs, tag = 'smem constant byte address 0x4 - core index']
  #allocation1 [shape = 'u32[144,128]{1,0:T(1,128)}', space=vmem, size = 0x12000, scoped, tag = 'internal scratch']
  %s0 = inlined_call_operand.vmem [shape: f32[13,128], index: 0, kind: input, shape index: {}]
  %s1 = inlined_call_operand.hbm [shape: f32[128,512], index: 1, kind: input, shape index: {}]
  %s2 = inlined_call_operand.hbm [shape: f32[1,512], index: 2, kind: input, shape index: {}]
  %s3 = inlined_call_operand.hbm [shape: f32[512,1024], index: 3, kind: input, shape index: {}]
  %s4 = inlined_call_operand.hbm [shape: f32[1,1024], index: 4, kind: input, shape index: {}]
  %s5 = inlined_call_operand.vmem [shape: f32[13,1024], index: 5, kind: output, shape index: {}]
  %s6 = sld [smem:[#allocation0]]
  $region46: #{_decoder_apply.1} parent=0
    _
  %s8 = ssub.s32 1, %s6
  %s9 = scalar_select 0, %s8, %s6
  $region1: #{_decoder_apply.1} parent=0
    #allocation2 [shape = 'u8[262144]{0}', space=vmem, size = 0x40000, scoped, tag = 'input window, operand 1, single buffered']
    #allocation3 [shape = 's32[1]{0}', space=sflag, size = 0x4, scoped, tag = 'scoped memory for _decoder_apply.1']
    #allocation4 [shape = 'u8[2048]{0}', space=vmem, size = 0x800, scoped, tag = 'input window, operand 2, single buffered']
    #allocation5 [shape = 's32[1]{0}', space=sflag, size = 0x4, scoped, tag = 'scoped memory for _decoder_apply.1']
    #allocation6 [shape = 'u8[2097152]{0}', space=vmem, size = 0x200000, scoped, tag = 'input window, operand 3, single buffered']
    #allocation7 [shape = 'u8[4096]{0}', space=vmem, size = 0x1000, scoped, tag = 'input window, operand 4, single buffered']
    #allocation8 [shape = 's32[1]{0}', space=sflag, size = 0x4, scoped, tag = 'scoped memory for _decoder_apply.1']
    %10 = vsyncpa [#allocation3], 0
    %11 = vsyncpa [#allocation5], 0
    %12 = vsyncpa [#allocation8], 0
    // Predicated region
    $region2: #{_decoder_apply.1} parent=1 // pred_check
      _
    $region3: #{_decoder_apply.1} parent=1 // pred_check_branch
      %14 = sbr.rel (0) target = $region5
    $region4: #{_decoder_apply.1} parent=1 // pred_region
      _
    $region5: #{_decoder_apply.1} parent=1 // pred_fallthru
      _
    // Predicated region
    $region6: #{_decoder_apply.1} parent=1 // pred_check
      _
    $region7: #{_decoder_apply.1} parent=1 // pred_check_branch
      %16 = sbr.rel (0) target = $region9
    $region8: #{_decoder_apply.1} parent=1 // pred_region
      %s18 = ssub.s32 8192, 8192
      %19 = vsyncadd [#allocation3], %s18
      %s20 = sshll.u32 [#allocation2], 4
      %s21 = int_to_ptr.vmem [resolvable:$true] %s20
      %26 = dma.hbm_to_vmem [thread:$0]  %s1, 8192, %s21, [#allocation3], 512, 512, 32
    $region9: #{_decoder_apply.1} parent=1 // pred_fallthru
      _
    // Predicated region
    $region10: #{_decoder_apply.1} parent=1 // pred_check
      _
    $region11: #{_decoder_apply.1} parent=1 // pred_check_branch
      %28 = sbr.rel (0) target = $region13
    $region12: #{_decoder_apply.1} parent=1 // pred_region
      %s30 = ssub.s32 64, 64
      %31 = vsyncadd [#allocation5], %s30
      %s33 = sshll.u32 [#allocation4], 4
      %s34 = int_to_ptr.vmem [resolvable:$true] %s33
      %36 = dma.hbm_to_vmem [thread:$0]  %s2, 64, %s34, [#allocation5]
    $region13: #{_decoder_apply.1} parent=1 // pred_fallthru
      _
    // Predicated region
    $region14: #{_decoder_apply.1} parent=1 // pred_check
      _
    $region15: #{_decoder_apply.1} parent=1 // pred_check_branch
      %38 = sbr.rel (0) target = $region17
    $region16: #{_decoder_apply.1} parent=1 // pred_region
      %s40 = ssub.s32 65536, 65536
      %41 = vsyncadd [#allocation5], %s40
      %s42 = sshll.u32 [#allocation6], 4
      %s43 = int_to_ptr.vmem [resolvable:$true] %s42
      %48 = dma.hbm_to_vmem [thread:$0]  %s3, 65536, %s43, [#allocation5], 1024, 1024, 64
    $region17: #{_decoder_apply.1} parent=1 // pred_fallthru
      _
    // Predicated region
    $region18: #{_decoder_apply.1} parent=1 // pred_check
      _
    $region19: #{_decoder_apply.1} parent=1 // pred_check_branch
      %50 = sbr.rel (0) target = $region21
    $region20: #{_decoder_apply.1} parent=1 // pred_region
      %s52 = ssub.s32 128, 128
      %53 = vsyncadd [#allocation8], %s52
      %s55 = sshll.u32 [#allocation7], 4
      %s56 = int_to_ptr.vmem [resolvable:$true] %s55
      %58 = dma.hbm_to_vmem [thread:$0]  %s4, 128, %s56, [#allocation8]
    $region21: #{_decoder_apply.1} parent=1 // pred_fallthru
      _
    // Predicated region
    $region22: #{_decoder_apply.1} parent=1 // pred_check
      _
    $region23: #{_decoder_apply.1} parent=1 // pred_check_branch
      %60 = sbr.rel (0) target = $region25
    $region24: #{_decoder_apply.1} parent=1 // pred_region
      %61 = dma.done [#allocation3], 8192
    $region25: #{_decoder_apply.1} parent=1 // pred_fallthru
      _
    // Predicated region
    $region26: #{_decoder_apply.1} parent=1 // pred_check
      _
    $region27: #{_decoder_apply.1} parent=1 // pred_check_branch
      %63 = sbr.rel (0) target = $region29
    $region28: #{_decoder_apply.1} parent=1 // pred_region
      %64 = dma.done [#allocation5], 64
    $region29: #{_decoder_apply.1} parent=1 // pred_fallthru
      _
    // Predicated region
    $region30: #{_decoder_apply.1} parent=1 // pred_check
      _
    $region31: #{_decoder_apply.1} parent=1 // pred_check_branch
      %66 = sbr.rel (0) target = $region33
    $region32: #{_decoder_apply.1} parent=1 // pred_region
      %67 = dma.done [#allocation5], 65536
    $region33: #{_decoder_apply.1} parent=1 // pred_fallthru
      _
    // Predicated region
    $region34: #{_decoder_apply.1} parent=1 // pred_check
      _
    $region35: #{_decoder_apply.1} parent=1 // pred_check_branch
      %69 = sbr.rel (0) target = $region37
    $region36: #{_decoder_apply.1} parent=1 // pred_region
      %70 = dma.done [#allocation8], 128
    $region37: #{_decoder_apply.1} parent=1 // pred_fallthru
      _
    %v71 = vld [vmem:[%s0] sm:$0xff]
    %v72 = vld [vmem:[%s0 + $0x8] sm:$0x1f]
    %v73 = vld [vmem:[#allocation2] sm:$0xff]
    %v74 = vld [vmem:[#allocation2 + $0x8] sm:$0xff]
    %v75 = vld [vmem:[#allocation2 + $0x10] sm:$0xff]
    %v76 = vld [vmem:[#allocation2 + $0x18] sm:$0xff]
    %v77 = vld [vmem:[#allocation2 + $0x20] sm:$0xff]
    %v78 = vld [vmem:[#allocation2 + $0x28] sm:$0xff]
    %v79 = vld [vmem:[#allocation2 + $0x30] sm:$0xff]
    %v80 = vld [vmem:[#allocation2 + $0x38] sm:$0xff]
    %v81 = vld [vmem:[#allocation2 + $0x40] sm:$0xff]
    %v82 = vld [vmem:[#allocation2 + $0x48] sm:$0xff]
    %v83 = vld [vmem:[#allocation2 + $0x50] sm:$0xff]
    %v84 = vld [vmem:[#allocation2 + $0x58] sm:$0xff]
    %v85 = vld [vmem:[#allocation2 + $0x60] sm:$0xff]
    %v86 = vld [vmem:[#allocation2 + $0x68] sm:$0xff]
    %v87 = vld [vmem:[#allocation2 + $0x70] sm:$0xff]
    %v88 = vld [vmem:[#allocation2 + $0x78] sm:$0xff]
    %v89 = vld [vmem:[#allocation2 + $0x80] sm:$0xff]
    %v90 = vld [vmem:[#allocation2 + $0x88] sm:$0xff]
    %v91 = vld [vmem:[#allocation2 + $0x90] sm:$0xff]
    %v92 = vld [vmem:[#allocation2 + $0x98] sm:$0xff]
    %v93 = vld [vmem:[#allocation2 + $0xa0] sm:$0xff]
    %v94 = vld [vmem:[#allocation2 + $0xa8] sm:$0xff]
    %v95 = vld [vmem:[#allocation2 + $0xb0] sm:$0xff]
    %v96 = vld [vmem:[#allocation2 + $0xb8] sm:$0xff]
    %v97 = vld [vmem:[#allocation2 + $0xc0] sm:$0xff]
    %v98 = vld [vmem:[#allocation2 + $0xc8] sm:$0xff]
    %v99 = vld [vmem:[#allocation2 + $0xd0] sm:$0xff]
    %v100 = vld [vmem:[#allocation2 + $0xd8] sm:$0xff]
    %v101 = vld [vmem:[#allocation2 + $0xe0] sm:$0xff]
    %v102 = vld [vmem:[#allocation2 + $0xe8] sm:$0xff]
    %v103 = vld [vmem:[#allocation2 + $0xf0] sm:$0xff]
    %v104 = vld [vmem:[#allocation2 + $0xf8] sm:$0xff]
    %v105 = vld [vmem:[#allocation2 + $0x100] sm:$0xff]
    %v106 = vld [vmem:[#allocation2 + $0x108] sm:$0xff]
    %v107 = vld [vmem:[#allocation2 + $0x110] sm:$0xff]
    %v108 = vld [vmem:[#allocation2 + $0x118] sm:$0xff]
    %v109 = vld [vmem:[#allocation2 + $0x120] sm:$0xff]
    %v110 = vld [vmem:[#allocation2 + $0x128] sm:$0xff]
    %v111 = vld [vmem:[#allocation2 + $0x130] sm:$0xff]
    %v112 = vld [vmem:[#allocation2 + $0x138] sm:$0xff]
    %v113 = vld [vmem:[#allocation2 + $0x140] sm:$0xff]
    %v114 = vld [vmem:[#allocation2 + $0x148] sm:$0xff]
    %v115 = vld [vmem:[#allocation2 + $0x150] sm:$0xff]
    %v116 = vld [vmem:[#allocation2 + $0x158] sm:$0xff]
    %v117 = vld [vmem:[#allocation2 + $0x160] sm:$0xff]
    %v118 = vld [vmem:[#allocation2 + $0x168] sm:$0xff]
    %v119 = vld [vmem:[#allocation2 + $0x170] sm:$0xff]
    %v120 = vld [vmem:[#allocation2 + $0x178] sm:$0xff]
    %v121 = vld [vmem:[#allocation2 + $0x180] sm:$0xff]
    %v122 = vld [vmem:[#allocation2 + $0x188] sm:$0xff]
    %v123 = vld [vmem:[#allocation2 + $0x190] sm:$0xff]
    %v124 = vld [vmem:[#allocation2 + $0x198] sm:$0xff]
    %v125 = vld [vmem:[#allocation2 + $0x1a0] sm:$0xff]
    %v126 = vld [vmem:[#allocation2 + $0x1a8] sm:$0xff]
    %v127 = vld [vmem:[#allocation2 + $0x1b0] sm:$0xff]
    %v128 = vld [vmem:[#allocation2 + $0x1b8] sm:$0xff]
    %v129 = vld [vmem:[#allocation2 + $0x1c0] sm:$0xff]
    %v130 = vld [vmem:[#allocation2 + $0x1c8] sm:$0xff]
    %v131 = vld [vmem:[#allocation2 + $0x1d0] sm:$0xff]
    %v132 = vld [vmem:[#allocation2 + $0x1d8] sm:$0xff]
    %v133 = vld [vmem:[#allocation2 + $0x1e0] sm:$0xff]
    %v134 = vld [vmem:[#allocation2 + $0x1e8] sm:$0xff]
    %v135 = vld [vmem:[#allocation2 + $0x1f0] sm:$0xff]
    %v136 = vld [vmem:[#allocation2 + $0x1f8] sm:$0xff]
    %v137 = vld [vmem:[#allocation4] sm:$0xf]
    %v139 = vlaneseq
    %v140 = vshrl.u32 %v139, 7
    %v141 = vsub.s32 0, %v140
    %v142 = vrot.slane %v137, %v141
    %v143 = vlaneseq
    %v144 = vshrl.u32 %v143, 7
    %v145 = vsub.s32 1, %v144
    %v146 = vrot.slane %v137, %v145
    %v147 = vlaneseq
    %v148 = vshrl.u32 %v147, 7
    %v149 = vsub.s32 2, %v148
    %v150 = vrot.slane %v137, %v149
    %v151 = vlaneseq
    %v152 = vshrl.u32 %v151, 7
    %v153 = vsub.s32 3, %v152
    %v154 = vrot.slane %v137, %v153
    %159 = vmatprep.subr.mxu0 %v134
    %160 = vmatpush1.msra.mxu0 %v133
    %161 = vmatprep.subr.mxu0 %v130
    %162 = vmatpush1.msra.mxu0 %v129
    %163 = vmatprep.subr.mxu0 %v126
    %164 = vmatpush1.msra.mxu0 %v125
    %165 = vmatprep.subr.mxu0 %v122
    %166 = vmatpush1.msra.mxu0 %v121
    %167 = vmatprep.subr.mxu0 %v118
    %168 = vmatpush1.msra.mxu0 %v117
    %169 = vmatprep.subr.mxu0 %v114
    %170 = vmatpush1.msra.mxu0 %v113
    %171 = vmatprep.subr.mxu0 %v110
    %172 = vmatpush1.msra.mxu0 %v109
    %173 = vmatprep.subr.mxu0 %v106
    %174 = vmatpush1.msra.mxu0 %v105
    %175 = vmatprep.subr.mxu0 %v102
    %176 = vmatpush1.msra.mxu0 %v101
    %177 = vmatprep.subr.mxu0 %v98
    %178 = vmatpush1.msra.mxu0 %v97
    %179 = vmatprep.subr.mxu0 %v94
    %180 = vmatpush1.msra.mxu0 %v93
    %181 = vmatprep.subr.mxu0 %v90
    %182 = vmatpush1.msra.mxu0 %v89
    %183 = vmatprep.subr.mxu0 %v86
    %184 = vmatpush1.msra.mxu0 %v85
    %185 = vmatprep.subr.mxu0 %v82
    %186 = vmatpush1.msra.mxu0 %v81
    %187 = vmatprep.subr.mxu0 %v78
    %188 = vmatpush1.msra.mxu0 %v77
    %189 = vmatprep.subr.mxu0 %v74
    %190 = vmatpush1.msra.mxu0 %v73
    %191 = vmatprep.subr.mxu0 0.0
    %192 = vmatpush2.msra.mxu0 0.0
    %193 = vmatprep.subr.mxu0 0.0
    %194 = vmatpush2.msra.mxu0 0.0
    %195 = vmatprep.subr.mxu0 0.0
    %196 = vmatpush2.msra.mxu0 0.0
    %197 = vmatprep.subr.mxu0 0.0
    %198 = vmatpush2.msra.mxu0 0.0
    %199 = vmatprep.subr.mxu0 0.0
    %200 = vmatpush2.msra.mxu0 0.0
    %201 = vmatprep.subr.mxu0 0.0
    %202 = vmatpush2.msra.mxu0 0.0
    %203 = vmatprep.subr.mxu0 0.0
    %204 = vmatpush2.msra.mxu0 0.0
    %205 = vmatprep.subr.mxu0 0.0
    %206 = vmatpush2.msra.mxu0 0.0
    %207 = vmatprep.subr.mxu0 0.0
    %208 = vmatpush2.msra.mxu0 0.0
    %209 = vmatprep.subr.mxu0 0.0
    %210 = vmatpush2.msra.mxu0 0.0
    %211 = vmatprep.subr.mxu0 0.0
    %212 = vmatpush2.msra.mxu0 0.0
    %213 = vmatprep.subr.mxu0 0.0
    %214 = vmatpush2.msra.mxu0 0.0
    %215 = vmatprep.subr.mxu0 0.0
    %216 = vmatpush2.msra.mxu0 0.0
    %217 = vmatprep.subr.mxu0 0.0
    %218 = vmatpush2.msra.mxu0 0.0
    %219 = vmatprep.subr.mxu0 0.0
    %220 = vmatpush2.msra.mxu0 0.0
    %221 = vmatprep.subr.mxu0 0.0
    %222 = vmatpush2.msra.mxu0 0.0
    %223 = vmatprep.mubr.f32.mxu0 0.0
    %224 = vmatmul.mubr.f32.gmra.mxu0 %v71
    %v225 = vpop.f32.mrf.mxu0
    %v226 = vadd.f32 %v142, %v225
    %v227 = vpop.f32.mrf.mxu0
    %v228 = vadd.f32 %v146, %v227
    %229 = vmatprep.mubr.f32.mxu0 0.0
    %230 = vmatmul.mubr.f32.gmra.mxu0 %v72
    %v231 = vpop.f32.mrf.mxu0
    %v232 = vadd.f32 %v142, %v231
    %v233 = vpop.f32.mrf.mxu0
    %v234 = vadd.f32 %v146, %v233
    %235 = vdwg.mxu0
    %236 = vmatprep.subr.mxu0 %v136
    %237 = vmatpush1.msra.mxu0 %v135
    %238 = vmatprep.subr.mxu0 %v132
    %239 = vmatpush1.msra.mxu0 %v131
    %240 = vmatprep.subr.mxu0 %v128
    %241 = vmatpush1.msra.mxu0 %v127
    %242 = vmatprep.subr.mxu0 %v124
    %243 = vmatpush1.msra.mxu0 %v123
    %244 = vmatprep.subr.mxu0 %v120
    %245 = vmatpush1.msra.mxu0 %v119
    %246 = vmatprep.subr.mxu0 %v116
    %247 = vmatpush1.msra.mxu0 %v115
    %248 = vmatprep.subr.mxu0 %v112
    %249 = vmatpush1.msra.mxu0 %v111
    %250 = vmatprep.subr.mxu0 %v108
    %251 = vmatpush1.msra.mxu0 %v107
    %252 = vmatprep.subr.mxu0 %v104
    %253 = vmatpush1.msra.mxu0 %v103
    %254 = vmatprep.subr.mxu0 %v100
    %255 = vmatpush1.msra.mxu0 %v99
    %256 = vmatprep.subr.mxu0 %v96
    %257 = vmatpush1.msra.mxu0 %v95
    %258 = vmatprep.subr.mxu0 %v92
    %259 = vmatpush1.msra.mxu0 %v91
    %260 = vmatprep.subr.mxu0 %v88
    %261 = vmatpush1.msra.mxu0 %v87
    %262 = vmatprep.subr.mxu0 %v84
    %263 = vmatpush1.msra.mxu0 %v83
    %264 = vmatprep.subr.mxu0 %v80
    %265 = vmatpush1.msra.mxu0 %v79
    %266 = vmatprep.subr.mxu0 %v76
    %267 = vmatpush1.msra.mxu0 %v75
    %268 = vmatprep.subr.mxu0 0.0
    %269 = vmatpush2.msra.mxu0 0.0
    %270 = vmatprep.subr.mxu0 0.0
    %271 = vmatpush2.msra.mxu0 0.0
    %272 = vmatprep.subr.mxu0 0.0
    %273 = vmatpush2.msra.mxu0 0.0
    %274 = vmatprep.subr.mxu0 0.0
    %275 = vmatpush2.msra.mxu0 0.0
    %276 = vmatprep.subr.mxu0 0.0
    %277 = vmatpush2.msra.mxu0 0.0
    %278 = vmatprep.subr.mxu0 0.0
    %279 = vmatpush2.msra.mxu0 0.0
    %280 = vmatprep.subr.mxu0 0.0
    %281 = vmatpush2.msra.mxu0 0.0
    %282 = vmatprep.subr.mxu0 0.0
    %283 = vmatpush2.msra.mxu0 0.0
    %284 = vmatprep.subr.mxu0 0.0
    %285 = vmatpush2.msra.mxu0 0.0
    %286 = vmatprep.subr.mxu0 0.0
    %287 = vmatpush2.msra.mxu0 0.0
    %288 = vmatprep.subr.mxu0 0.0
    %289 = vmatpush2.msra.mxu0 0.0
    %290 = vmatprep.subr.mxu0 0.0
    %291 = vmatpush2.msra.mxu0 0.0
    %292 = vmatprep.subr.mxu0 0.0
    %293 = vmatpush2.msra.mxu0 0.0
    %294 = vmatprep.subr.mxu0 0.0
    %295 = vmatpush2.msra.mxu0 0.0
    %296 = vmatprep.subr.mxu0 0.0
    %297 = vmatpush2.msra.mxu0 0.0
    %298 = vmatprep.subr.mxu0 0.0
    %299 = vmatpush2.msra.mxu0 0.0
    %300 = vmatprep.mubr.f32.mxu0 0.0
    %301 = vmatmul.mubr.f32.gmra.mxu0 %v71
    %v302 = vpop.f32.mrf.mxu0
    %v303 = vadd.f32 %v150, %v302
    %v304 = vpop.f32.mrf.mxu0
    %v305 = vadd.f32 %v154, %v304
    %306 = vmatprep.mubr.f32.mxu0 0.0
    %307 = vmatmul.mubr.f32.gmra.mxu0 %v72
    %v308 = vpop.f32.mrf.mxu0
    %v309 = vadd.f32 %v150, %v308
    %v310 = vpop.f32.mrf.mxu0
    %v311 = vadd.f32 %v154, %v310
    %312 = vdwg.mxu0
    %v313 = vmax.f32 %v226, 0.0
    %v314 = vmax.f32 %v228, 0.0
    %v315 = vmax.f32 %v303, 0.0
    %v316 = vmax.f32 %v305, 0.0
    %v317 = vmax.f32 %v232, 0.0
    %v318 = vmax.f32 %v234, 0.0
    %v319 = vmax.f32 %v309, 0.0
    %v320 = vmax.f32 %v311, 0.0
    %v321 = vld [vmem:[#allocation6] sm:$0xff]
    %v322 = vld [vmem:[#allocation6 + $0x8] sm:$0xff]
    %v323 = vld [vmem:[#allocation6 + $0x10] sm:$0xff]
    %v324 = vld [vmem:[#allocation6 + $0x18] sm:$0xff]
    %v325 = vld [vmem:[#allocation6 + $0x20] sm:$0xff]
    %v326 = vld [vmem:[#allocation6 + $0x28] sm:$0xff]
    %v327 = vld [vmem:[#allocation6 + $0x30] sm:$0xff]
    %v328 = vld [vmem:[#allocation6 + $0x38] sm:$0xff]
    %v329 = vld [vmem:[#allocation6 + $0x40] sm:$0xff]
    %v330 = vld [vmem:[#allocation6 + $0x48] sm:$0xff]
    %v331 = vld [vmem:[#allocation6 + $0x50] sm:$0xff]
    %v332 = vld [vmem:[#allocation6 + $0x58] sm:$0xff]
    %v333 = vld [vmem:[#allocation6 + $0x60] sm:$0xff]
    %v334 = vld [vmem:[#allocation6 + $0x68] sm:$0xff]
    %v335 = vld [vmem:[#allocation6 + $0x70] sm:$0xff]
    %v336 = vld [vmem:[#allocation6 + $0x78] sm:$0xff]
    %v337 = vld [vmem:[#allocation6 + $0x80] sm:$0xff]
    %v338 = vld [vmem:[#allocation6 + $0x88] sm:$0xff]
    %v339 = vld [vmem:[#allocation6 + $0x90] sm:$0xff]
    %v340 = vld [vmem:[#allocation6 + $0x98] sm:$0xff]
    %v341 = vld [vmem:[#allocation6 + $0xa0] sm:$0xff]
    %v342 = vld [vmem:[#allocation6 + $0xa8] sm:$0xff]
    %v343 = vld [vmem:[#allocation6 + $0xb0] sm:$0xff]
    %v344 = vld [vmem:[#allocation6 + $0xb8] sm:$0xff]
    %v345 = vld [vmem:[#allocation6 + $0xc0] sm:$0xff]
    %v346 = vld [vmem:[#allocation6 + $0xc8] sm:$0xff]
    %v347 = vld [vmem:[#allocation6 + $0xd0] sm:$0xff]
    %v348 = vld [vmem:[#allocation6 + $0xd8] sm:$0xff]
    %v349 = vld [vmem:[#allocation6 + $0xe0] sm:$0xff]
    %v350 = vld [vmem:[#allocation6 + $0xe8] sm:$0xff]
    %v351 = vld [vmem:[#allocation6 + $0xf0] sm:$0xff]
    %v352 = vld [vmem:[#allocation6 + $0xf8] sm:$0xff]
    %v353 = vld [vmem:[#allocation6 + $0x100] sm:$0xff]
    %v354 = vld [vmem:[#allocation6 + $0x108] sm:$0xff]
    %v355 = vld [vmem:[#allocation6 + $0x110] sm:$0xff]
    %v356 = vld [vmem:[#allocation6 + $0x118] sm:$0xff]
    %v357 = vld [vmem:[#allocation6 + $0x120] sm:$0xff]
    %v358 = vld [vmem:[#allocation6 + $0x128] sm:$0xff]
    %v359 = vld [vmem:[#allocation6 + $0x130] sm:$0xff]
    %v360 = vld [vmem:[#allocation6 + $0x138] sm:$0xff]
    %v361 = vld [vmem:[#allocation6 + $0x140] sm:$0xff]
    %v362 = vld [vmem:[#allocation6 + $0x148] sm:$0xff]
    %v363 = vld [vmem:[#allocation6 + $0x150] sm:$0xff]
    %v364 = vld [vmem:[#allocation6 + $0x158] sm:$0xff]
    %v365 = vld [vmem:[#allocation6 + $0x160] sm:$0xff]
    %v366 = vld [vmem:[#allocation6 + $0x168] sm:$0xff]
    %v367 = vld [vmem:[#allocation6 + $0x170] sm:$0xff]
    %v368 = vld [vmem:[#allocation6 + $0x178] sm:$0xff]
    %v369 = vld [vmem:[#allocation6 + $0x180] sm:$0xff]
    %v370 = vld [vmem:[#allocation6 + $0x188] sm:$0xff]
    %v371 = vld [vmem:[#allocation6 + $0x190] sm:$0xff]
    %v372 = vld [vmem:[#allocation6 + $0x198] sm:$0xff]
    %v373 = vld [vmem:[#allocation6 + $0x1a0] sm:$0xff]
    %v374 = vld [vmem:[#allocation6 + $0x1a8] sm:$0xff]
    %v375 = vld [vmem:[#allocation6 + $0x1b0] sm:$0xff]
    %v376 = vld [vmem:[#allocation6 + $0x1b8] sm:$0xff]
    %v377 = vld [vmem:[#allocation6 + $0x1c0] sm:$0xff]
    %v378 = vld [vmem:[#allocation6 + $0x1c8] sm:$0xff]
    %v379 = vld [vmem:[#allocation6 + $0x1d0] sm:$0xff]
    %v380 = vld [vmem:[#allocation6 + $0x1d8] sm:$0xff]
    %v381 = vld [vmem:[#allocation6 + $0x1e0] sm:$0xff]
    %v382 = vld [vmem:[#allocation6 + $0x1e8] sm:$0xff]
    %v383 = vld [vmem:[#allocation6 + $0x1f0] sm:$0xff]
    %v384 = vld [vmem:[#allocation6 + $0x1f8] sm:$0xff]
    %v385 = vld [vmem:[#allocation6 + $0x200] sm:$0xff]
    %v386 = vld [vmem:[#allocation6 + $0x208] sm:$0xff]
    %v387 = vld [vmem:[#allocation6 + $0x210] sm:$0xff]
    %v388 = vld [vmem:[#allocation6 + $0x218] sm:$0xff]
    %v389 = vld [vmem:[#allocation6 + $0x220] sm:$0xff]
    %v390 = vld [vmem:[#allocation6 + $0x228] sm:$0xff]
    %v391 = vld [vmem:[#allocation6 + $0x230] sm:$0xff]
    %v392 = vld [vmem:[#allocation6 + $0x238] sm:$0xff]
    %v393 = vld [vmem:[#allocation6 + $0x240] sm:$0xff]
    %v394 = vld [vmem:[#allocation6 + $0x248] sm:$0xff]
    %v395 = vld [vmem:[#allocation6 + $0x250] sm:$0xff]
    %v396 = vld [vmem:[#allocation6 + $0x258] sm:$0xff]
    %v397 = vld [vmem:[#allocation6 + $0x260] sm:$0xff]
    %v398 = vld [vmem:[#allocation6 + $0x268] sm:$0xff]
    %v399 = vld [vmem:[#allocation6 + $0x270] sm:$0xff]
    %v400 = vld [vmem:[#allocation6 + $0x278] sm:$0xff]
    %v401 = vld [vmem:[#allocation6 + $0x280] sm:$0xff]
    %v402 = vld [vmem:[#allocation6 + $0x288] sm:$0xff]
    %v403 = vld [vmem:[#allocation6 + $0x290] sm:$0xff]
    %v404 = vld [vmem:[#allocation6 + $0x298] sm:$0xff]
    %v405 = vld [vmem:[#allocation6 + $0x2a0] sm:$0xff]
    %v406 = vld [vmem:[#allocation6 + $0x2a8] sm:$0xff]
    %v407 = vld [vmem:[#allocation6 + $0x2b0] sm:$0xff]
    %v408 = vld [vmem:[#allocation6 + $0x2b8] sm:$0xff]
    %v409 = vld [vmem:[#allocation6 + $0x2c0] sm:$0xff]
    %v410 = vld [vmem:[#allocation6 + $0x2c8] sm:$0xff]
    %v411 = vld [vmem:[#allocation6 + $0x2d0] sm:$0xff]
    %v412 = vld [vmem:[#allocation6 + $0x2d8] sm:$0xff]
    %v413 = vld [vmem:[#allocation6 + $0x2e0] sm:$0xff]
    %v414 = vld [vmem:[#allocation6 + $0x2e8] sm:$0xff]
    %v415 = vld [vmem:[#allocation6 + $0x2f0] sm:$0xff]
    %v416 = vld [vmem:[#allocation6 + $0x2f8] sm:$0xff]
    %v417 = vld [vmem:[#allocation6 + $0x300] sm:$0xff]
    %v418 = vld [vmem:[#allocation6 + $0x308] sm:$0xff]
    %v419 = vld [vmem:[#allocation6 + $0x310] sm:$0xff]
    %v420 = vld [vmem:[#allocation6 + $0x318] sm:$0xff]
    %v421 = vld [vmem:[#allocation6 + $0x320] sm:$0xff]
    %v422 = vld [vmem:[#allocation6 + $0x328] sm:$0xff]
    %v423 = vld [vmem:[#allocation6 + $0x330] sm:$0xff]
    %v424 = vld [vmem:[#allocation6 + $0x338] sm:$0xff]
    %v425 = vld [vmem:[#allocation6 + $0x340] sm:$0xff]
    %v426 = vld [vmem:[#allocation6 + $0x348] sm:$0xff]
    %v427 = vld [vmem:[#allocation6 + $0x350] sm:$0xff]
    %v428 = vld [vmem:[#allocation6 + $0x358] sm:$0xff]
    %v429 = vld [vmem:[#allocation6 + $0x360] sm:$0xff]
    %v430 = vld [vmem:[#allocation6 + $0x368] sm:$0xff]
    %v431 = vld [vmem:[#allocation6 + $0x370] sm:$0xff]
    %v432 = vld [vmem:[#allocation6 + $0x378] sm:$0xff]
    %v433 = vld [vmem:[#allocation6 + $0x380] sm:$0xff]
    %v434 = vld [vmem:[#allocation6 + $0x388] sm:$0xff]
    %v435 = vld [vmem:[#allocation6 + $0x390] sm:$0xff]
    %v436 = vld [vmem:[#allocation6 + $0x398] sm:$0xff]
    %v437 = vld [vmem:[#allocation6 + $0x3a0] sm:$0xff]
    %v438 = vld [vmem:[#allocation6 + $0x3a8] sm:$0xff]
    %v439 = vld [vmem:[#allocation6 + $0x3b0] sm:$0xff]
    %v440 = vld [vmem:[#allocation6 + $0x3b8] sm:$0xff]
    %v441 = vld [vmem:[#allocation6 + $0x3c0] sm:$0xff]
    %v442 = vld [vmem:[#allocation6 + $0x3c8] sm:$0xff]
    %v443 = vld [vmem:[#allocation6 + $0x3d0] sm:$0xff]
    %v444 = vld [vmem:[#allocation6 + $0x3d8] sm:$0xff]
    %v445 = vld [vmem:[#allocation6 + $0x3e0] sm:$0xff]
    %v446 = vld [vmem:[#allocation6 + $0x3e8] sm:$0xff]
    %v447 = vld [vmem:[#allocation6 + $0x3f0] sm:$0xff]
    %v448 = vld [vmem:[#allocation6 + $0x3f8] sm:$0xff]
    %v449 = vld [vmem:[#allocation6 + $0x400] sm:$0xff]
    %v450 = vld [vmem:[#allocation6 + $0x408] sm:$0xff]
    %v451 = vld [vmem:[#allocation6 + $0x410] sm:$0xff]
    %v452 = vld [vmem:[#allocation6 + $0x418] sm:$0xff]
    %v453 = vld [vmem:[#allocation6 + $0x420] sm:$0xff]
    %v454 = vld [vmem:[#allocation6 + $0x428] sm:$0xff]
    %v455 = vld [vmem:[#allocation6 + $0x430] sm:$0xff]
    %v456 = vld [vmem:[#allocation6 + $0x438] sm:$0xff]
    %v457 = vld [vmem:[#allocation6 + $0x440] sm:$0xff]
    %v458 = vld [vmem:[#allocation6 + $0x448] sm:$0xff]
    %v459 = vld [vmem:[#allocation6 + $0x450] sm:$0xff]
    %v460 = vld [vmem:[#allocation6 + $0x458] sm:$0xff]
    %v461 = vld [vmem:[#allocation6 + $0x460] sm:$0xff]
    %v462 = vld [vmem:[#allocation6 + $0x468] sm:$0xff]
    %v463 = vld [vmem:[#allocation6 + $0x470] sm:$0xff]
    %v464 = vld [vmem:[#allocation6 + $0x478] sm:$0xff]
    %v465 = vld [vmem:[#allocation6 + $0x480] sm:$0xff]
    %v466 = vld [vmem:[#allocation6 + $0x488] sm:$0xff]
    %v467 = vld [vmem:[#allocation6 + $0x490] sm:$0xff]
    %v468 = vld [vmem:[#allocation6 + $0x498] sm:$0xff]
    %v469 = vld [vmem:[#allocation6 + $0x4a0] sm:$0xff]
    %v470 = vld [vmem:[#allocation6 + $0x4a8] sm:$0xff]
    %v471 = vld [vmem:[#allocation6 + $0x4b0] sm:$0xff]
    %v472 = vld [vmem:[#allocation6 + $0x4b8] sm:$0xff]
    %v473 = vld [vmem:[#allocation6 + $0x4c0] sm:$0xff]
    %v474 = vld [vmem:[#allocation6 + $0x4c8] sm:$0xff]
    %v475 = vld [vmem:[#allocation6 + $0x4d0] sm:$0xff]
    %v476 = vld [vmem:[#allocation6 + $0x4d8] sm:$0xff]
    %v477 = vld [vmem:[#allocation6 + $0x4e0] sm:$0xff]
    %v478 = vld [vmem:[#allocation6 + $0x4e8] sm:$0xff]
    %v479 = vld [vmem:[#allocation6 + $0x4f0] sm:$0xff]
    %v480 = vld [vmem:[#allocation6 + $0x4f8] sm:$0xff]
    %v481 = vld [vmem:[#allocation6 + $0x500] sm:$0xff]
    %v482 = vld [vmem:[#allocation6 + $0x508] sm:$0xff]
    %v483 = vld [vmem:[#allocation6 + $0x510] sm:$0xff]
    %v484 = vld [vmem:[#allocation6 + $0x518] sm:$0xff]
    %v485 = vld [vmem:[#allocation6 + $0x520] sm:$0xff]
    %v486 = vld [vmem:[#allocation6 + $0x528] sm:$0xff]
    %v487 = vld [vmem:[#allocation6 + $0x530] sm:$0xff]
    %v488 = vld [vmem:[#allocation6 + $0x538] sm:$0xff]
    %v489 = vld [vmem:[#allocation6 + $0x540] sm:$0xff]
    %v490 = vld [vmem:[#allocation6 + $0x548] sm:$0xff]
    %v491 = vld [vmem:[#allocation6 + $0x550] sm:$0xff]
    %v492 = vld [vmem:[#allocation6 + $0x558] sm:$0xff]
    %v493 = vld [vmem:[#allocation6 + $0x560] sm:$0xff]
    %v494 = vld [vmem:[#allocation6 + $0x568] sm:$0xff]
    %v495 = vld [vmem:[#allocation6 + $0x570] sm:$0xff]
    %v496 = vld [vmem:[#allocation6 + $0x578] sm:$0xff]
    %v497 = vld [vmem:[#allocation6 + $0x580] sm:$0xff]
    %v498 = vld [vmem:[#allocation6 + $0x588] sm:$0xff]
    %v499 = vld [vmem:[#allocation6 + $0x590] sm:$0xff]
    %v500 = vld [vmem:[#allocation6 + $0x598] sm:$0xff]
    %v501 = vld [vmem:[#allocation6 + $0x5a0] sm:$0xff]
    %v502 = vld [vmem:[#allocation6 + $0x5a8] sm:$0xff]
    %v503 = vld [vmem:[#allocation6 + $0x5b0] sm:$0xff]
    %v504 = vld [vmem:[#allocation6 + $0x5b8] sm:$0xff]
    %v505 = vld [vmem:[#allocation6 + $0x5c0] sm:$0xff]
    %v506 = vld [vmem:[#allocation6 + $0x5c8] sm:$0xff]
    %v507 = vld [vmem:[#allocation6 + $0x5d0] sm:$0xff]
    %v508 = vld [vmem:[#allocation6 + $0x5d8] sm:$0xff]
    %v509 = vld [vmem:[#allocation6 + $0x5e0] sm:$0xff]
    %v510 = vld [vmem:[#allocation6 + $0x5e8] sm:$0xff]
    %v511 = vld [vmem:[#allocation6 + $0x5f0] sm:$0xff]
    %v512 = vld [vmem:[#allocation6 + $0x5f8] sm:$0xff]
    %v513 = vld [vmem:[#allocation6 + $0x600] sm:$0xff]
    %v514 = vld [vmem:[#allocation6 + $0x608] sm:$0xff]
    %v515 = vld [vmem:[#allocation6 + $0x610] sm:$0xff]
    %v516 = vld [vmem:[#allocation6 + $0x618] sm:$0xff]
    %v517 = vld [vmem:[#allocation6 + $0x620] sm:$0xff]
    %v518 = vld [vmem:[#allocation6 + $0x628] sm:$0xff]
    %v519 = vld [vmem:[#allocation6 + $0x630] sm:$0xff]
    %v520 = vld [vmem:[#allocation6 + $0x638] sm:$0xff]
    %v521 = vld [vmem:[#allocation6 + $0x640] sm:$0xff]
    %v522 = vld [vmem:[#allocation6 + $0x648] sm:$0xff]
    %v523 = vld [vmem:[#allocation6 + $0x650] sm:$0xff]
    %v524 = vld [vmem:[#allocation6 + $0x658] sm:$0xff]
    %v525 = vld [vmem:[#allocation6 + $0x660] sm:$0xff]
    %v526 = vld [vmem:[#allocation6 + $0x668] sm:$0xff]
    %v527 = vld [vmem:[#allocation6 + $0x670] sm:$0xff]
    %v528 = vld [vmem:[#allocation6 + $0x678] sm:$0xff]
    %v529 = vld [vmem:[#allocation6 + $0x680] sm:$0xff]
    %v530 = vld [vmem:[#allocation6 + $0x688] sm:$0xff]
    %v531 = vld [vmem:[#allocation6 + $0x690] sm:$0xff]
    %v532 = vld [vmem:[#allocation6 + $0x698] sm:$0xff]
    %v533 = vld [vmem:[#allocation6 + $0x6a0] sm:$0xff]
    %v534 = vld [vmem:[#allocation6 + $0x6a8] sm:$0xff]
    %v535 = vld [vmem:[#allocation6 + $0x6b0] sm:$0xff]
    %v536 = vld [vmem:[#allocation6 + $0x6b8] sm:$0xff]
    %v537 = vld [vmem:[#allocation6 + $0x6c0] sm:$0xff]
    %v538 = vld [vmem:[#allocation6 + $0x6c8] sm:$0xff]
    %v539 = vld [vmem:[#allocation6 + $0x6d0] sm:$0xff]
    %v540 = vld [vmem:[#allocation6 + $0x6d8] sm:$0xff]
    %v541 = vld [vmem:[#allocation6 + $0x6e0] sm:$0xff]
    %v542 = vld [vmem:[#allocation6 + $0x6e8] sm:$0xff]
    %v543 = vld [vmem:[#allocation6 + $0x6f0] sm:$0xff]
    %v544 = vld [vmem:[#allocation6 + $0x6f8] sm:$0xff]
    %v545 = vld [vmem:[#allocation6 + $0x700] sm:$0xff]
    %v546 = vld [vmem:[#allocation6 + $0x708] sm:$0xff]
    %v547 = vld [vmem:[#allocation6 + $0x710] sm:$0xff]
    %v548 = vld [vmem:[#allocation6 + $0x718] sm:$0xff]
    %v549 = vld [vmem:[#allocation6 + $0x720] sm:$0xff]
    %v550 = vld [vmem:[#allocation6 + $0x728] sm:$0xff]
    %v551 = vld [vmem:[#allocation6 + $0x730] sm:$0xff]
    %v552 = vld [vmem:[#allocation6 + $0x738] sm:$0xff]
    %v553 = vld [vmem:[#allocation6 + $0x740] sm:$0xff]
    %v554 = vld [vmem:[#allocation6 + $0x748] sm:$0xff]
    %v555 = vld [vmem:[#allocation6 + $0x750] sm:$0xff]
    %v556 = vld [vmem:[#allocation6 + $0x758] sm:$0xff]
    %v557 = vld [vmem:[#allocation6 + $0x760] sm:$0xff]
    %v558 = vld [vmem:[#allocation6 + $0x768] sm:$0xff]
    %v559 = vld [vmem:[#allocation6 + $0x770] sm:$0xff]
    %v560 = vld [vmem:[#allocation6 + $0x778] sm:$0xff]
    %v561 = vld [vmem:[#allocation6 + $0x780] sm:$0xff]
    %v562 = vld [vmem:[#allocation6 + $0x788] sm:$0xff]
    %v563 = vld [vmem:[#allocation6 + $0x790] sm:$0xff]
    %v564 = vld [vmem:[#allocation6 + $0x798] sm:$0xff]
    %v565 = vld [vmem:[#allocation6 + $0x7a0] sm:$0xff]
    %v566 = vld [vmem:[#allocation6 + $0x7a8] sm:$0xff]
    %v567 = vld [vmem:[#allocation6 + $0x7b0] sm:$0xff]
    %v568 = vld [vmem:[#allocation6 + $0x7b8] sm:$0xff]
    %v569 = vld [vmem:[#allocation6 + $0x7c0] sm:$0xff]
    %v570 = vld [vmem:[#allocation6 + $0x7c8] sm:$0xff]
    %v571 = vld [vmem:[#allocation6 + $0x7d0] sm:$0xff]
    %v572 = vld [vmem:[#allocation6 + $0x7d8] sm:$0xff]
    %v573 = vld [vmem:[#allocation6 + $0x7e0] sm:$0xff]
    %v574 = vld [vmem:[#allocation6 + $0x7e8] sm:$0xff]
    %v575 = vld [vmem:[#allocation6 + $0x7f0] sm:$0xff]
    %v576 = vld [vmem:[#allocation6 + $0x7f8] sm:$0xff]
    %v577 = vld [vmem:[#allocation6 + $0x800] sm:$0xff]
    %v578 = vld [vmem:[#allocation6 + $0x808] sm:$0xff]
    %v579 = vld [vmem:[#allocation6 + $0x810] sm:$0xff]
    %v580 = vld [vmem:[#allocation6 + $0x818] sm:$0xff]
    %v581 = vld [vmem:[#allocation6 + $0x820] sm:$0xff]
    %v582 = vld [vmem:[#allocation6 + $0x828] sm:$0xff]
    %v583 = vld [vmem:[#allocation6 + $0x830] sm:$0xff]
    %v584 = vld [vmem:[#allocation6 + $0x838] sm:$0xff]
    %v585 = vld [vmem:[#allocation6 + $0x840] sm:$0xff]
    %v586 = vld [vmem:[#allocation6 + $0x848] sm:$0xff]
    %v587 = vld [vmem:[#allocation6 + $0x850] sm:$0xff]
    %v588 = vld [vmem:[#allocation6 + $0x858] sm:$0xff]
    %v589 = vld [vmem:[#allocation6 + $0x860] sm:$0xff]
    %v590 = vld [vmem:[#allocation6 + $0x868] sm:$0xff]
    %v591 = vld [vmem:[#allocation6 + $0x870] sm:$0xff]
    %v592 = vld [vmem:[#allocation6 + $0x878] sm:$0xff]
    %v593 = vld [vmem:[#allocation6 + $0x880] sm:$0xff]
    %v594 = vld [vmem:[#allocation6 + $0x888] sm:$0xff]
    %v595 = vld [vmem:[#allocation6 + $0x890] sm:$0xff]
    %v596 = vld [vmem:[#allocation6 + $0x898] sm:$0xff]
    %v597 = vld [vmem:[#allocation6 + $0x8a0] sm:$0xff]
    %v598 = vld [vmem:[#allocation6 + $0x8a8] sm:$0xff]
    %v599 = vld [vmem:[#allocation6 + $0x8b0] sm:$0xff]
    %v600 = vld [vmem:[#allocation6 + $0x8b8] sm:$0xff]
    %v601 = vld [vmem:[#allocation6 + $0x8c0] sm:$0xff]
    %v602 = vld [vmem:[#allocation6 + $0x8c8] sm:$0xff]
    %v603 = vld [vmem:[#allocation6 + $0x8d0] sm:$0xff]
    %v604 = vld [vmem:[#allocation6 + $0x8d8] sm:$0xff]
    %v605 = vld [vmem:[#allocation6 + $0x8e0] sm:$0xff]
    %v606 = vld [vmem:[#allocation6 + $0x8e8] sm:$0xff]
    %v607 = vld [vmem:[#allocation6 + $0x8f0] sm:$0xff]
    %v608 = vld [vmem:[#allocation6 + $0x8f8] sm:$0xff]
    %v609 = vld [vmem:[#allocation6 + $0x900] sm:$0xff]
    %v610 = vld [vmem:[#allocation6 + $0x908] sm:$0xff]
    %v611 = vld [vmem:[#allocation6 + $0x910] sm:$0xff]
    %v612 = vld [vmem:[#allocation6 + $0x918] sm:$0xff]
    %v613 = vld [vmem:[#allocation6 + $0x920] sm:$0xff]
    %v614 = vld [vmem:[#allocation6 + $0x928] sm:$0xff]
    %v615 = vld [vmem:[#allocation6 + $0x930] sm:$0xff]
    %v616 = vld [vmem:[#allocation6 + $0x938] sm:$0xff]
    %v617 = vld [vmem:[#allocation6 + $0x940] sm:$0xff]
    %v618 = vld [vmem:[#allocation6 + $0x948] sm:$0xff]
    %v619 = vld [vmem:[#allocation6 + $0x950] sm:$0xff]
    %v620 = vld [vmem:[#allocation6 + $0x958] sm:$0xff]
    %v621 = vld [vmem:[#allocation6 + $0x960] sm:$0xff]
    %v622 = vld [vmem:[#allocation6 + $0x968] sm:$0xff]
    %v623 = vld [vmem:[#allocation6 + $0x970] sm:$0xff]
    %v624 = vld [vmem:[#allocation6 + $0x978] sm:$0xff]
    %v625 = vld [vmem:[#allocation6 + $0x980] sm:$0xff]
    %v626 = vld [vmem:[#allocation6 + $0x988] sm:$0xff]
    %v627 = vld [vmem:[#allocation6 + $0x990] sm:$0xff]
    %v628 = vld [vmem:[#allocation6 + $0x998] sm:$0xff]
    %v629 = vld [vmem:[#allocation6 + $0x9a0] sm:$0xff]
    %v630 = vld [vmem:[#allocation6 + $0x9a8] sm:$0xff]
    %v631 = vld [vmem:[#allocation6 + $0x9b0] sm:$0xff]
    %v632 = vld [vmem:[#allocation6 + $0x9b8] sm:$0xff]
    %v633 = vld [vmem:[#allocation6 + $0x9c0] sm:$0xff]
    %v634 = vld [vmem:[#allocation6 + $0x9c8] sm:$0xff]
    %v635 = vld [vmem:[#allocation6 + $0x9d0] sm:$0xff]
    %v636 = vld [vmem:[#allocation6 + $0x9d8] sm:$0xff]
    %v637 = vld [vmem:[#allocation6 + $0x9e0] sm:$0xff]
    %v638 = vld [vmem:[#allocation6 + $0x9e8] sm:$0xff]
    %v639 = vld [vmem:[#allocation6 + $0x9f0] sm:$0xff]
    %v640 = vld [vmem:[#allocation6 + $0x9f8] sm:$0xff]
    %v641 = vld [vmem:[#allocation6 + $0xa00] sm:$0xff]
    %v642 = vld [vmem:[#allocation6 + $0xa08] sm:$0xff]
    %v643 = vld [vmem:[#allocation6 + $0xa10] sm:$0xff]
    %v644 = vld [vmem:[#allocation6 + $0xa18] sm:$0xff]
    %v645 = vld [vmem:[#allocation6 + $0xa20] sm:$0xff]
    %v646 = vld [vmem:[#allocation6 + $0xa28] sm:$0xff]
    %v647 = vld [vmem:[#allocation6 + $0xa30] sm:$0xff]
    %v648 = vld [vmem:[#allocation6 + $0xa38] sm:$0xff]
    %v649 = vld [vmem:[#allocation6 + $0xa40] sm:$0xff]
    %v650 = vld [vmem:[#allocation6 + $0xa48] sm:$0xff]
    %v651 = vld [vmem:[#allocation6 + $0xa50] sm:$0xff]
    %v652 = vld [vmem:[#allocation6 + $0xa58] sm:$0xff]
    %v653 = vld [vmem:[#allocation6 + $0xa60] sm:$0xff]
    %v654 = vld [vmem:[#allocation6 + $0xa68] sm:$0xff]
    %v655 = vld [vmem:[#allocation6 + $0xa70] sm:$0xff]
    %v656 = vld [vmem:[#allocation6 + $0xa78] sm:$0xff]
    %v657 = vld [vmem:[#allocation6 + $0xa80] sm:$0xff]
    %v658 = vld [vmem:[#allocation6 + $0xa88] sm:$0xff]
    %v659 = vld [vmem:[#allocation6 + $0xa90] sm:$0xff]
    %v660 = vld [vmem:[#allocation6 + $0xa98] sm:$0xff]
    %v661 = vld [vmem:[#allocation6 + $0xaa0] sm:$0xff]
    %v662 = vld [vmem:[#allocation6 + $0xaa8] sm:$0xff]
    %v663 = vld [vmem:[#allocation6 + $0xab0] sm:$0xff]
    %v664 = vld [vmem:[#allocation6 + $0xab8] sm:$0xff]
    %v665 = vld [vmem:[#allocation6 + $0xac0] sm:$0xff]
    %v666 = vld [vmem:[#allocation6 + $0xac8] sm:$0xff]
    %v667 = vld [vmem:[#allocation6 + $0xad0] sm:$0xff]
    %v668 = vld [vmem:[#allocation6 + $0xad8] sm:$0xff]
    %v669 = vld [vmem:[#allocation6 + $0xae0] sm:$0xff]
    %v670 = vld [vmem:[#allocation6 + $0xae8] sm:$0xff]
    %v671 = vld [vmem:[#allocation6 + $0xaf0] sm:$0xff]
    %v672 = vld [vmem:[#allocation6 + $0xaf8] sm:$0xff]
    %v673 = vld [vmem:[#allocation6 + $0xb00] sm:$0xff]
    %v674 = vld [vmem:[#allocation6 + $0xb08] sm:$0xff]
    %v675 = vld [vmem:[#allocation6 + $0xb10] sm:$0xff]
    %v676 = vld [vmem:[#allocation6 + $0xb18] sm:$0xff]
    %v677 = vld [vmem:[#allocation6 + $0xb20] sm:$0xff]
    %v678 = vld [vmem:[#allocation6 + $0xb28] sm:$0xff]
    %v679 = vld [vmem:[#allocation6 + $0xb30] sm:$0xff]
    %v680 = vld [vmem:[#allocation6 + $0xb38] sm:$0xff]
    %v681 = vld [vmem:[#allocation6 + $0xb40] sm:$0xff]
    %v682 = vld [vmem:[#allocation6 + $0xb48] sm:$0xff]
    %v683 = vld [vmem:[#allocation6 + $0xb50] sm:$0xff]
    %v684 = vld [vmem:[#allocation6 + $0xb58] sm:$0xff]
    %v685 = vld [vmem:[#allocation6 + $0xb60] sm:$0xff]
    %v686 = vld [vmem:[#allocation6 + $0xb68] sm:$0xff]
    %v687 = vld [vmem:[#allocation6 + $0xb70] sm:$0xff]
    %v688 = vld [vmem:[#allocation6 + $0xb78] sm:$0xff]
    %v689 = vld [vmem:[#allocation6 + $0xb80] sm:$0xff]
    %v690 = vld [vmem:[#allocation6 + $0xb88] sm:$0xff]
    %v691 = vld [vmem:[#allocation6 + $0xb90] sm:$0xff]
    %v692 = vld [vmem:[#allocation6 + $0xb98] sm:$0xff]
    %v693 = vld [vmem:[#allocation6 + $0xba0] sm:$0xff]
    %v694 = vld [vmem:[#allocation6 + $0xba8] sm:$0xff]
    %v695 = vld [vmem:[#allocation6 + $0xbb0] sm:$0xff]
    %v696 = vld [vmem:[#allocation6 + $0xbb8] sm:$0xff]
    %v697 = vld [vmem:[#allocation6 + $0xbc0] sm:$0xff]
    %v698 = vld [vmem:[#allocation6 + $0xbc8] sm:$0xff]
    %v699 = vld [vmem:[#allocation6 + $0xbd0] sm:$0xff]
    %v700 = vld [vmem:[#allocation6 + $0xbd8] sm:$0xff]
    %v701 = vld [vmem:[#allocation6 + $0xbe0] sm:$0xff]
    %v702 = vld [vmem:[#allocation6 + $0xbe8] sm:$0xff]
    %v703 = vld [vmem:[#allocation6 + $0xbf0] sm:$0xff]
    %v704 = vld [vmem:[#allocation6 + $0xbf8] sm:$0xff]
    %v705 = vld [vmem:[#allocation6 + $0xc00] sm:$0xff]
    %v706 = vld [vmem:[#allocation6 + $0xc08] sm:$0xff]
    %v707 = vld [vmem:[#allocation6 + $0xc10] sm:$0xff]
    %v708 = vld [vmem:[#allocation6 + $0xc18] sm:$0xff]
    %v709 = vld [vmem:[#allocation6 + $0xc20] sm:$0xff]
    %v710 = vld [vmem:[#allocation6 + $0xc28] sm:$0xff]
    %v711 = vld [vmem:[#allocation6 + $0xc30] sm:$0xff]
    %v712 = vld [vmem:[#allocation6 + $0xc38] sm:$0xff]
    %v713 = vld [vmem:[#allocation6 + $0xc40] sm:$0xff]
    %v714 = vld [vmem:[#allocation6 + $0xc48] sm:$0xff]
    %v715 = vld [vmem:[#allocation6 + $0xc50] sm:$0xff]
    %v716 = vld [vmem:[#allocation6 + $0xc58] sm:$0xff]
    %v717 = vld [vmem:[#allocation6 + $0xc60] sm:$0xff]
    %v718 = vld [vmem:[#allocation6 + $0xc68] sm:$0xff]
    %v719 = vld [vmem:[#allocation6 + $0xc70] sm:$0xff]
    %v720 = vld [vmem:[#allocation6 + $0xc78] sm:$0xff]
    %v721 = vld [vmem:[#allocation6 + $0xc80] sm:$0xff]
    %v722 = vld [vmem:[#allocation6 + $0xc88] sm:$0xff]
    %v723 = vld [vmem:[#allocation6 + $0xc90] sm:$0xff]
    %v724 = vld [vmem:[#allocation6 + $0xc98] sm:$0xff]
    %v725 = vld [vmem:[#allocation6 + $0xca0] sm:$0xff]
    %v726 = vld [vmem:[#allocation6 + $0xca8] sm:$0xff]
    %v727 = vld [vmem:[#allocation6 + $0xcb0] sm:$0xff]
    %v728 = vld [vmem:[#allocation6 + $0xcb8] sm:$0xff]
    %v729 = vld [vmem:[#allocation6 + $0xcc0] sm:$0xff]
    %v730 = vld [vmem:[#allocation6 + $0xcc8] sm:$0xff]
    %v731 = vld [vmem:[#allocation6 + $0xcd0] sm:$0xff]
    %v732 = vld [vmem:[#allocation6 + $0xcd8] sm:$0xff]
    %v733 = vld [vmem:[#allocation6 + $0xce0] sm:$0xff]
    %v734 = vld [vmem:[#allocation6 + $0xce8] sm:$0xff]
    %v735 = vld [vmem:[#allocation6 + $0xcf0] sm:$0xff]
    %v736 = vld [vmem:[#allocation6 + $0xcf8] sm:$0xff]
    %v737 = vld [vmem:[#allocation6 + $0xd00] sm:$0xff]
    %v738 = vld [vmem:[#allocation6 + $0xd08] sm:$0xff]
    %v739 = vld [vmem:[#allocation6 + $0xd10] sm:$0xff]
    %v740 = vld [vmem:[#allocation6 + $0xd18] sm:$0xff]
    %v741 = vld [vmem:[#allocation6 + $0xd20] sm:$0xff]
    %v742 = vld [vmem:[#allocation6 + $0xd28] sm:$0xff]
    %v743 = vld [vmem:[#allocation6 + $0xd30] sm:$0xff]
    %v744 = vld [vmem:[#allocation6 + $0xd38] sm:$0xff]
    %v745 = vld [vmem:[#allocation6 + $0xd40] sm:$0xff]
    %v746 = vld [vmem:[#allocation6 + $0xd48] sm:$0xff]
    %v747 = vld [vmem:[#allocation6 + $0xd50] sm:$0xff]
    %v748 = vld [vmem:[#allocation6 + $0xd58] sm:$0xff]
    %v749 = vld [vmem:[#allocation6 + $0xd60] sm:$0xff]
    %v750 = vld [vmem:[#allocation6 + $0xd68] sm:$0xff]
    %v751 = vld [vmem:[#allocation6 + $0xd70] sm:$0xff]
    %v752 = vld [vmem:[#allocation6 + $0xd78] sm:$0xff]
    %v753 = vld [vmem:[#allocation6 + $0xd80] sm:$0xff]
    %v754 = vld [vmem:[#allocation6 + $0xd88] sm:$0xff]
    %v755 = vld [vmem:[#allocation6 + $0xd90] sm:$0xff]
    %v756 = vld [vmem:[#allocation6 + $0xd98] sm:$0xff]
    %v757 = vld [vmem:[#allocation6 + $0xda0] sm:$0xff]
    %v758 = vld [vmem:[#allocation6 + $0xda8] sm:$0xff]
    %v759 = vld [vmem:[#allocation6 + $0xdb0] sm:$0xff]
    %v760 = vld [vmem:[#allocation6 + $0xdb8] sm:$0xff]
    %v761 = vld [vmem:[#allocation6 + $0xdc0] sm:$0xff]
    %v762 = vld [vmem:[#allocation6 + $0xdc8] sm:$0xff]
    %v763 = vld [vmem:[#allocation6 + $0xdd0] sm:$0xff]
    %v764 = vld [vmem:[#allocation6 + $0xdd8] sm:$0xff]
    %v765 = vld [vmem:[#allocation6 + $0xde0] sm:$0xff]
    %v766 = vld [vmem:[#allocation6 + $0xde8] sm:$0xff]
    %v767 = vld [vmem:[#allocation6 + $0xdf0] sm:$0xff]
    %v768 = vld [vmem:[#allocation6 + $0xdf8] sm:$0xff]
    %v769 = vld [vmem:[#allocation6 + $0xe00] sm:$0xff]
    %v770 = vld [vmem:[#allocation6 + $0xe08] sm:$0xff]
    %v771 = vld [vmem:[#allocation6 + $0xe10] sm:$0xff]
    %v772 = vld [vmem:[#allocation6 + $0xe18] sm:$0xff]
    %v773 = vld [vmem:[#allocation6 + $0xe20] sm:$0xff]
    %v774 = vld [vmem:[#allocation6 + $0xe28] sm:$0xff]
    %v775 = vld [vmem:[#allocation6 + $0xe30] sm:$0xff]
    %v776 = vld [vmem:[#allocation6 + $0xe38] sm:$0xff]
    %v777 = vld [vmem:[#allocation6 + $0xe40] sm:$0xff]
    %v778 = vld [vmem:[#allocation6 + $0xe48] sm:$0xff]
    %v779 = vld [vmem:[#allocation6 + $0xe50] sm:$0xff]
    %v780 = vld [vmem:[#allocation6 + $0xe58] sm:$0xff]
    %v781 = vld [vmem:[#allocation6 + $0xe60] sm:$0xff]
    %v782 = vld [vmem:[#allocation6 + $0xe68] sm:$0xff]
    %v783 = vld [vmem:[#allocation6 + $0xe70] sm:$0xff]
    %v784 = vld [vmem:[#allocation6 + $0xe78] sm:$0xff]
    %v785 = vld [vmem:[#allocation6 + $0xe80] sm:$0xff]
    %v786 = vld [vmem:[#allocation6 + $0xe88] sm:$0xff]
    %v787 = vld [vmem:[#allocation6 + $0xe90] sm:$0xff]
    %v788 = vld [vmem:[#allocation6 + $0xe98] sm:$0xff]
    %v789 = vld [vmem:[#allocation6 + $0xea0] sm:$0xff]
    %v790 = vld [vmem:[#allocation6 + $0xea8] sm:$0xff]
    %v791 = vld [vmem:[#allocation6 + $0xeb0] sm:$0xff]
    %v792 = vld [vmem:[#allocation6 + $0xeb8] sm:$0xff]
    %v793 = vld [vmem:[#allocation6 + $0xec0] sm:$0xff]
    %v794 = vld [vmem:[#allocation6 + $0xec8] sm:$0xff]
    %v795 = vld [vmem:[#allocation6 + $0xed0] sm:$0xff]
    %v796 = vld [vmem:[#allocation6 + $0xed8] sm:$0xff]
    %v797 = vld [vmem:[#allocation6 + $0xee0] sm:$0xff]
    %v798 = vld [vmem:[#allocation6 + $0xee8] sm:$0xff]
    %v799 = vld [vmem:[#allocation6 + $0xef0] sm:$0xff]
    %v800 = vld [vmem:[#allocation6 + $0xef8] sm:$0xff]
    %v801 = vld [vmem:[#allocation6 + $0xf00] sm:$0xff]
    %v802 = vld [vmem:[#allocation6 + $0xf08] sm:$0xff]
    %v803 = vld [vmem:[#allocation6 + $0xf10] sm:$0xff]
    %v804 = vld [vmem:[#allocation6 + $0xf18] sm:$0xff]
    %v805 = vld [vmem:[#allocation6 + $0xf20] sm:$0xff]
    %v806 = vld [vmem:[#allocation6 + $0xf28] sm:$0xff]
    %v807 = vld [vmem:[#allocation6 + $0xf30] sm:$0xff]
    %v808 = vld [vmem:[#allocation6 + $0xf38] sm:$0xff]
    %v809 = vld [vmem:[#allocation6 + $0xf40] sm:$0xff]
    %v810 = vld [vmem:[#allocation6 + $0xf48] sm:$0xff]
    %v811 = vld [vmem:[#allocation6 + $0xf50] sm:$0xff]
    %v812 = vld [vmem:[#allocation6 + $0xf58] sm:$0xff]
    %v813 = vld [vmem:[#allocation6 + $0xf60] sm:$0xff]
    %v814 = vld [vmem:[#allocation6 + $0xf68] sm:$0xff]
    %v815 = vld [vmem:[#allocation6 + $0xf70] sm:$0xff]
    %v816 = vld [vmem:[#allocation6 + $0xf78] sm:$0xff]
    %v817 = vld [vmem:[#allocation6 + $0xf80] sm:$0xff]
    %v818 = vld [vmem:[#allocation6 + $0xf88] sm:$0xff]
    %v819 = vld [vmem:[#allocation6 + $0xf90] sm:$0xff]
    %v820 = vld [vmem:[#allocation6 + $0xf98] sm:$0xff]
    %v821 = vld [vmem:[#allocation6 + $0xfa0] sm:$0xff]
    %v822 = vld [vmem:[#allocation6 + $0xfa8] sm:$0xff]
    %v823 = vld [vmem:[#allocation6 + $0xfb0] sm:$0xff]
    %v824 = vld [vmem:[#allocation6 + $0xfb8] sm:$0xff]
    %v825 = vld [vmem:[#allocation6 + $0xfc0] sm:$0xff]
    %v826 = vld [vmem:[#allocation6 + $0xfc8] sm:$0xff]
    %v827 = vld [vmem:[#allocation6 + $0xfd0] sm:$0xff]
    %v828 = vld [vmem:[#allocation6 + $0xfd8] sm:$0xff]
    %v829 = vld [vmem:[#allocation6 + $0xfe0] sm:$0xff]
    %v830 = vld [vmem:[#allocation6 + $0xfe8] sm:$0xff]
    %v831 = vld [vmem:[#allocation6 + $0xff0] sm:$0xff]
    %v832 = vld [vmem:[#allocation6 + $0xff8] sm:$0xff]
    %v833 = vld [vmem:[#allocation7] sm:$0xff]
    %v835 = vlaneseq
    %v836 = vshrl.u32 %v835, 7
    %v837 = vsub.s32 0, %v836
    %v838 = vrot.slane %v833, %v837
    %v839 = vlaneseq
    %v840 = vshrl.u32 %v839, 7
    %v841 = vsub.s32 1, %v840
    %v842 = vrot.slane %v833, %v841
    %v843 = vlaneseq
    %v844 = vshrl.u32 %v843, 7
    %v845 = vsub.s32 2, %v844
    %v846 = vrot.slane %v833, %v845
    %v847 = vlaneseq
    %v848 = vshrl.u32 %v847, 7
    %v849 = vsub.s32 3, %v848
    %v850 = vrot.slane %v833, %v849
    %v851 = vlaneseq
    %v852 = vshrl.u32 %v851, 7
    %v853 = vsub.s32 4, %v852
    %v854 = vrot.slane %v833, %v853
    %v855 = vlaneseq
    %v856 = vshrl.u32 %v855, 7
    %v857 = vsub.s32 5, %v856
    %v858 = vrot.slane %v833, %v857
    %v859 = vlaneseq
    %v860 = vshrl.u32 %v859, 7
    %v861 = vsub.s32 6, %v860
    %v862 = vrot.slane %v833, %v861
    %v863 = vlaneseq
    %v864 = vshrl.u32 %v863, 7
    %v865 = vsub.s32 7, %v864
    %v866 = vrot.slane %v833, %v865
    %875 = vmatprep.subr.mxu0 %v442
    %876 = vmatpush1.msra.mxu0 %v441
    %877 = vmatprep.subr.mxu0 %v434
    %878 = vmatpush1.msra.mxu0 %v433
    %879 = vmatprep.subr.mxu0 %v426
    %880 = vmatpush1.msra.mxu0 %v425
    %881 = vmatprep.subr.mxu0 %v418
    %882 = vmatpush1.msra.mxu0 %v417
    %883 = vmatprep.subr.mxu0 %v410
    %884 = vmatpush1.msra.mxu0 %v409
    %885 = vmatprep.subr.mxu0 %v402
    %886 = vmatpush1.msra.mxu0 %v401
    %887 = vmatprep.subr.mxu0 %v394
    %888 = vmatpush1.msra.mxu0 %v393
    %889 = vmatprep.subr.mxu0 %v386
    %890 = vmatpush1.msra.mxu0 %v385
    %891 = vmatprep.subr.mxu0 %v378
    %892 = vmatpush1.msra.mxu0 %v377
    %893 = vmatprep.subr.mxu0 %v370
    %894 = vmatpush1.msra.mxu0 %v369
    %895 = vmatprep.subr.mxu0 %v362
    %896 = vmatpush1.msra.mxu0 %v361
    %897 = vmatprep.subr.mxu0 %v354
    %898 = vmatpush1.msra.mxu0 %v353
    %899 = vmatprep.subr.mxu0 %v346
    %900 = vmatpush1.msra.mxu0 %v345
    %901 = vmatprep.subr.mxu0 %v338
    %902 = vmatpush1.msra.mxu0 %v337
    %903 = vmatprep.subr.mxu0 %v330
    %904 = vmatpush1.msra.mxu0 %v329
    %905 = vmatprep.subr.mxu0 %v322
    %906 = vmatpush1.msra.mxu0 %v321
    %907 = vmatprep.subr.mxu0 %v570
    %908 = vmatpush2.msra.mxu0 %v569
    %909 = vmatprep.subr.mxu0 %v562
    %910 = vmatpush2.msra.mxu0 %v561
    %911 = vmatprep.subr.mxu0 %v554
    %912 = vmatpush2.msra.mxu0 %v553
    %913 = vmatprep.subr.mxu0 %v546
    %914 = vmatpush2.msra.mxu0 %v545
    %915 = vmatprep.subr.mxu0 %v538
    %916 = vmatpush2.msra.mxu0 %v537
    %917 = vmatprep.subr.mxu0 %v530
    %918 = vmatpush2.msra.mxu0 %v529
    %919 = vmatprep.subr.mxu0 %v522
    %920 = vmatpush2.msra.mxu0 %v521
    %921 = vmatprep.subr.mxu0 %v514
    %922 = vmatpush2.msra.mxu0 %v513
    %923 = vmatprep.subr.mxu0 %v506
    %924 = vmatpush2.msra.mxu0 %v505
    %925 = vmatprep.subr.mxu0 %v498
    %926 = vmatpush2.msra.mxu0 %v497
    %927 = vmatprep.subr.mxu0 %v490
    %928 = vmatpush2.msra.mxu0 %v489
    %929 = vmatprep.subr.mxu0 %v482
    %930 = vmatpush2.msra.mxu0 %v481
    %931 = vmatprep.subr.mxu0 %v474
    %932 = vmatpush2.msra.mxu0 %v473
    %933 = vmatprep.subr.mxu0 %v466
    %934 = vmatpush2.msra.mxu0 %v465
    %935 = vmatprep.subr.mxu0 %v458
    %936 = vmatpush2.msra.mxu0 %v457
    %937 = vmatprep.subr.mxu0 %v450
    %938 = vmatpush2.msra.mxu0 %v449
    %939 = vmatprep.mubr.f32.mxu0 %v314
    %940 = vmatmul.mubr.f32.gmra.mxu0 %v313
    %v941 = vpop.f32.mrf.mxu0
    %v942 = vadd.f32 %v838, %v941
    %v943 = vpop.f32.mrf.mxu0
    %v944 = vadd.f32 %v842, %v943
    %945 = vmatprep.mubr.f32.mxu0 %v318
    %946 = vmatmul.mubr.f32.gmra.mxu0 %v317
    %v947 = vpop.f32.mrf.mxu0
    %v948 = vadd.f32 %v838, %v947
    %v949 = vpop.f32.mrf.mxu0
    %v950 = vadd.f32 %v842, %v949
    %951 = vdwg.mxu0
    %952 = vmatprep.subr.mxu0 %v698
    %953 = vmatpush1.msra.mxu0 %v697
    %954 = vmatprep.subr.mxu0 %v690
    %955 = vmatpush1.msra.mxu0 %v689
    %956 = vmatprep.subr.mxu0 %v682
    %957 = vmatpush1.msra.mxu0 %v681
    %958 = vmatprep.subr.mxu0 %v674
    %959 = vmatpush1.msra.mxu0 %v673
    %960 = vmatprep.subr.mxu0 %v666
    %961 = vmatpush1.msra.mxu0 %v665
    %962 = vmatprep.subr.mxu0 %v658
    %963 = vmatpush1.msra.mxu0 %v657
    %964 = vmatprep.subr.mxu0 %v650
    %965 = vmatpush1.msra.mxu0 %v649
    %966 = vmatprep.subr.mxu0 %v642
    %967 = vmatpush1.msra.mxu0 %v641
    %968 = vmatprep.subr.mxu0 %v634
    %969 = vmatpush1.msra.mxu0 %v633
    %970 = vmatprep.subr.mxu0 %v626
    %971 = vmatpush1.msra.mxu0 %v625
    %972 = vmatprep.subr.mxu0 %v618
    %973 = vmatpush1.msra.mxu0 %v617
    %974 = vmatprep.subr.mxu0 %v610
    %975 = vmatpush1.msra.mxu0 %v609
    %976 = vmatprep.subr.mxu0 %v602
    %977 = vmatpush1.msra.mxu0 %v601
    %978 = vmatprep.subr.mxu0 %v594
    %979 = vmatpush1.msra.mxu0 %v593
    %980 = vmatprep.subr.mxu0 %v586
    %981 = vmatpush1.msra.mxu0 %v585
    %982 = vmatprep.subr.mxu0 %v578
    %983 = vmatpush1.msra.mxu0 %v577
    %984 = vmatprep.subr.mxu0 %v826
    %985 = vmatpush2.msra.mxu0 %v825
    %986 = vmatprep.subr.mxu0 %v818
    %987 = vmatpush2.msra.mxu0 %v817
    %988 = vmatprep.subr.mxu0 %v810
    %989 = vmatpush2.msra.mxu0 %v809
    %990 = vmatprep.subr.mxu0 %v802
    %991 = vmatpush2.msra.mxu0 %v801
    %992 = vmatprep.subr.mxu0 %v794
    %993 = vmatpush2.msra.mxu0 %v793
    %994 = vmatprep.subr.mxu0 %v786
    %995 = vmatpush2.msra.mxu0 %v785
    %996 = vmatprep.subr.mxu0 %v778
    %997 = vmatpush2.msra.mxu0 %v777
    %998 = vmatprep.subr.mxu0 %v770
    %999 = vmatpush2.msra.mxu0 %v769
    %1000 = vmatprep.subr.mxu0 %v762
    %1001 = vmatpush2.msra.mxu0 %v761
    %1002 = vmatprep.subr.mxu0 %v754
    %1003 = vmatpush2.msra.mxu0 %v753
    %1004 = vmatprep.subr.mxu0 %v746
    %1005 = vmatpush2.msra.mxu0 %v745
    %1006 = vmatprep.subr.mxu0 %v738
    %1007 = vmatpush2.msra.mxu0 %v737
    %1008 = vmatprep.subr.mxu0 %v730
    %1009 = vmatpush2.msra.mxu0 %v729
    %1010 = vmatprep.subr.mxu0 %v722
    %1011 = vmatpush2.msra.mxu0 %v721
    %1012 = vmatprep.subr.mxu0 %v714
    %1013 = vmatpush2.msra.mxu0 %v713
    %1014 = vmatprep.subr.mxu0 %v706
    %1015 = vmatpush2.msra.mxu0 %v705
    %1016 = vmatprep.mubr.f32.mxu0 %v316
    %1017 = vmatmul.mubr.f32.gmra.mxu0 %v315
    %v1018 = vpop.f32.mrf.mxu0
    %v1019 = vadd.f32 %v942, %v1018
    %v1020 = vpop.f32.mrf.mxu0
    %v1021 = vadd.f32 %v944, %v1020
    %1022 = vmatprep.mubr.f32.mxu0 %v320
    %1023 = vmatmul.mubr.f32.gmra.mxu0 %v319
    %v1024 = vpop.f32.mrf.mxu0
    %v1025 = vadd.f32 %v948, %v1024
    %v1026 = vpop.f32.mrf.mxu0
    %v1027 = vadd.f32 %v950, %v1026
    %1028 = vdwg.mxu0
    %1029 = vmatprep.subr.mxu0 %v444
    %1030 = vmatpush1.msra.mxu0 %v443
    %1031 = vmatprep.subr.mxu0 %v436
    %1032 = vmatpush1.msra.mxu0 %v435
    %1033 = vmatprep.subr.mxu0 %v428
    %1034 = vmatpush1.msra.mxu0 %v427
    %1035 = vmatprep.subr.mxu0 %v420
    %1036 = vmatpush1.msra.mxu0 %v419
    %1037 = vmatprep.subr.mxu0 %v412
    %1038 = vmatpush1.msra.mxu0 %v411
    %1039 = vmatprep.subr.mxu0 %v404
    %1040 = vmatpush1.msra.mxu0 %v403
    %1041 = vmatprep.subr.mxu0 %v396
    %1042 = vmatpush1.msra.mxu0 %v395
    %1043 = vmatprep.subr.mxu0 %v388
    %1044 = vmatpush1.msra.mxu0 %v387
    %1045 = vmatprep.subr.mxu0 %v380
    %1046 = vmatpush1.msra.mxu0 %v379
    %1047 = vmatprep.subr.mxu0 %v372
    %1048 = vmatpush1.msra.mxu0 %v371
    %1049 = vmatprep.subr.mxu0 %v364
    %1050 = vmatpush1.msra.mxu0 %v363
    %1051 = vmatprep.subr.mxu0 %v356
    %1052 = vmatpush1.msra.mxu0 %v355
    %1053 = vmatprep.subr.mxu0 %v348
    %1054 = vmatpush1.msra.mxu0 %v347
    %1055 = vmatprep.subr.mxu0 %v340
    %1056 = vmatpush1.msra.mxu0 %v339
    %1057 = vmatprep.subr.mxu0 %v332
    %1058 = vmatpush1.msra.mxu0 %v331
    %1059 = vmatprep.subr.mxu0 %v324
    %1060 = vmatpush1.msra.mxu0 %v323
    %1061 = vmatprep.subr.mxu0 %v572
    %1062 = vmatpush2.msra.mxu0 %v571
    %1063 = vmatprep.subr.mxu0 %v564
    %1064 = vmatpush2.msra.mxu0 %v563
    %1065 = vmatprep.subr.mxu0 %v556
    %1066 = vmatpush2.msra.mxu0 %v555
    %1067 = vmatprep.subr.mxu0 %v548
    %1068 = vmatpush2.msra.mxu0 %v547
    %1069 = vmatprep.subr.mxu0 %v540
    %1070 = vmatpush2.msra.mxu0 %v539
    %1071 = vmatprep.subr.mxu0 %v532
    %1072 = vmatpush2.msra.mxu0 %v531
    %1073 = vmatprep.subr.mxu0 %v524
    %1074 = vmatpush2.msra.mxu0 %v523
    %1075 = vmatprep.subr.mxu0 %v516
    %1076 = vmatpush2.msra.mxu0 %v515
    %1077 = vmatprep.subr.mxu0 %v508
    %1078 = vmatpush2.msra.mxu0 %v507
    %1079 = vmatprep.subr.mxu0 %v500
    %1080 = vmatpush2.msra.mxu0 %v499
    %1081 = vmatprep.subr.mxu0 %v492
    %1082 = vmatpush2.msra.mxu0 %v491
    %1083 = vmatprep.subr.mxu0 %v484
    %1084 = vmatpush2.msra.mxu0 %v483
    %1085 = vmatprep.subr.mxu0 %v476
    %1086 = vmatpush2.msra.mxu0 %v475
    %1087 = vmatprep.subr.mxu0 %v468
    %1088 = vmatpush2.msra.mxu0 %v467
    %1089 = vmatprep.subr.mxu0 %v460
    %1090 = vmatpush2.msra.mxu0 %v459
    %1091 = vmatprep.subr.mxu0 %v452
    %1092 = vmatpush2.msra.mxu0 %v451
    %1093 = vmatprep.mubr.f32.mxu0 %v314
    %1094 = vmatmul.mubr.f32.gmra.mxu0 %v313
    %v1095 = vpop.f32.mrf.mxu0
    %v1096 = vadd.f32 %v846, %v1095
    %v1097 = vpop.f32.mrf.mxu0
    %v1098 = vadd.f32 %v850, %v1097
    %1099 = vmatprep.mubr.f32.mxu0 %v318
    %1100 = vmatmul.mubr.f32.gmra.mxu0 %v317
    %v1101 = vpop.f32.mrf.mxu0
    %v1102 = vadd.f32 %v846, %v1101
    %v1103 = vpop.f32.mrf.mxu0
    %v1104 = vadd.f32 %v850, %v1103
    %1105 = vdwg.mxu0
    %1106 = vmatprep.subr.mxu0 %v700
    %1107 = vmatpush1.msra.mxu0 %v699
    %1108 = vmatprep.subr.mxu0 %v692
    %1109 = vmatpush1.msra.mxu0 %v691
    %1110 = vmatprep.subr.mxu0 %v684
    %1111 = vmatpush1.msra.mxu0 %v683
    %1112 = vmatprep.subr.mxu0 %v676
    %1113 = vmatpush1.msra.mxu0 %v675
    %1114 = vmatprep.subr.mxu0 %v668
    %1115 = vmatpush1.msra.mxu0 %v667
    %1116 = vmatprep.subr.mxu0 %v660
    %1117 = vmatpush1.msra.mxu0 %v659
    %1118 = vmatprep.subr.mxu0 %v652
    %1119 = vmatpush1.msra.mxu0 %v651
    %1120 = vmatprep.subr.mxu0 %v644
    %1121 = vmatpush1.msra.mxu0 %v643
    %1122 = vmatprep.subr.mxu0 %v636
    %1123 = vmatpush1.msra.mxu0 %v635
    %1124 = vmatprep.subr.mxu0 %v628
    %1125 = vmatpush1.msra.mxu0 %v627
    %1126 = vmatprep.subr.mxu0 %v620
    %1127 = vmatpush1.msra.mxu0 %v619
    %1128 = vmatprep.subr.mxu0 %v612
    %1129 = vmatpush1.msra.mxu0 %v611
    %1130 = vmatprep.subr.mxu0 %v604
    %1131 = vmatpush1.msra.mxu0 %v603
    %1132 = vmatprep.subr.mxu0 %v596
    %1133 = vmatpush1.msra.mxu0 %v595
    %1134 = vmatprep.subr.mxu0 %v588
    %1135 = vmatpush1.msra.mxu0 %v587
    %1136 = vmatprep.subr.mxu0 %v580
    %1137 = vmatpush1.msra.mxu0 %v579
    %1138 = vmatprep.subr.mxu0 %v828
    %1139 = vmatpush2.msra.mxu0 %v827
    %1140 = vmatprep.subr.mxu0 %v820
    %1141 = vmatpush2.msra.mxu0 %v819
    %1142 = vmatprep.subr.mxu0 %v812
    %1143 = vmatpush2.msra.mxu0 %v811
    %1144 = vmatprep.subr.mxu0 %v804
    %1145 = vmatpush2.msra.mxu0 %v803
    %1146 = vmatprep.subr.mxu0 %v796
    %1147 = vmatpush2.msra.mxu0 %v795
    %1148 = vmatprep.subr.mxu0 %v788
    %1149 = vmatpush2.msra.mxu0 %v787
    %1150 = vmatprep.subr.mxu0 %v780
    %1151 = vmatpush2.msra.mxu0 %v779
    %1152 = vmatprep.subr.mxu0 %v772
    %1153 = vmatpush2.msra.mxu0 %v771
    %1154 = vmatprep.subr.mxu0 %v764
    %1155 = vmatpush2.msra.mxu0 %v763
    %1156 = vmatprep.subr.mxu0 %v756
    %1157 = vmatpush2.msra.mxu0 %v755
    %1158 = vmatprep.subr.mxu0 %v748
    %1159 = vmatpush2.msra.mxu0 %v747
    %1160 = vmatprep.subr.mxu0 %v740
    %1161 = vmatpush2.msra.mxu0 %v739
    %1162 = vmatprep.subr.mxu0 %v732
    %1163 = vmatpush2.msra.mxu0 %v731
    %1164 = vmatprep.subr.mxu0 %v724
    %1165 = vmatpush2.msra.mxu0 %v723
    %1166 = vmatprep.subr.mxu0 %v716
    %1167 = vmatpush2.msra.mxu0 %v715
    %1168 = vmatprep.subr.mxu0 %v708
    %1169 = vmatpush2.msra.mxu0 %v707
    %1170 = vmatprep.mubr.f32.mxu0 %v316
    %1171 = vmatmul.mubr.f32.gmra.mxu0 %v315
    %v1172 = vpop.f32.mrf.mxu0
    %v1173 = vadd.f32 %v1096, %v1172
    %v1174 = vpop.f32.mrf.mxu0
    %v1175 = vadd.f32 %v1098, %v1174
    %1176 = vmatprep.mubr.f32.mxu0 %v320
    %1177 = vmatmul.mubr.f32.gmra.mxu0 %v319
    %v1178 = vpop.f32.mrf.mxu0
    %v1179 = vadd.f32 %v1102, %v1178
    %v1180 = vpop.f32.mrf.mxu0
    %v1181 = vadd.f32 %v1104, %v1180
    %1182 = vdwg.mxu0
    %1183 = vmatprep.subr.mxu0 %v446
    %1184 = vmatpush1.msra.mxu0 %v445
    %1185 = vmatprep.subr.mxu0 %v438
    %1186 = vmatpush1.msra.mxu0 %v437
    %1187 = vmatprep.subr.mxu0 %v430
    %1188 = vmatpush1.msra.mxu0 %v429
    %1189 = vmatprep.subr.mxu0 %v422
    %1190 = vmatpush1.msra.mxu0 %v421
    %1191 = vmatprep.subr.mxu0 %v414
    %1192 = vmatpush1.msra.mxu0 %v413
    %1193 = vmatprep.subr.mxu0 %v406
    %1194 = vmatpush1.msra.mxu0 %v405
    %1195 = vmatprep.subr.mxu0 %v398
    %1196 = vmatpush1.msra.mxu0 %v397
    %1197 = vmatprep.subr.mxu0 %v390
    %1198 = vmatpush1.msra.mxu0 %v389
    %1199 = vmatprep.subr.mxu0 %v382
    %1200 = vmatpush1.msra.mxu0 %v381
    %1201 = vmatprep.subr.mxu0 %v374
    %1202 = vmatpush1.msra.mxu0 %v373
    %1203 = vmatprep.subr.mxu0 %v366
    %1204 = vmatpush1.msra.mxu0 %v365
    %1205 = vmatprep.subr.mxu0 %v358
    %1206 = vmatpush1.msra.mxu0 %v357
    %1207 = vmatprep.subr.mxu0 %v350
    %1208 = vmatpush1.msra.mxu0 %v349
    %1209 = vmatprep.subr.mxu0 %v342
    %1210 = vmatpush1.msra.mxu0 %v341
    %1211 = vmatprep.subr.mxu0 %v334
    %1212 = vmatpush1.msra.mxu0 %v333
    %1213 = vmatprep.subr.mxu0 %v326
    %1214 = vmatpush1.msra.mxu0 %v325
    %1215 = vmatprep.subr.mxu0 %v574
    %1216 = vmatpush2.msra.mxu0 %v573
    %1217 = vmatprep.subr.mxu0 %v566
    %1218 = vmatpush2.msra.mxu0 %v565
    %1219 = vmatprep.subr.mxu0 %v558
    %1220 = vmatpush2.msra.mxu0 %v557
    %1221 = vmatprep.subr.mxu0 %v550
    %1222 = vmatpush2.msra.mxu0 %v549
    %1223 = vmatprep.subr.mxu0 %v542
    %1224 = vmatpush2.msra.mxu0 %v541
    %1225 = vmatprep.subr.mxu0 %v534
    %1226 = vmatpush2.msra.mxu0 %v533
    %1227 = vmatprep.subr.mxu0 %v526
    %1228 = vmatpush2.msra.mxu0 %v525
    %1229 = vmatprep.subr.mxu0 %v518
    %1230 = vmatpush2.msra.mxu0 %v517
    %1231 = vmatprep.subr.mxu0 %v510
    %1232 = vmatpush2.msra.mxu0 %v509
    %1233 = vmatprep.subr.mxu0 %v502
    %1234 = vmatpush2.msra.mxu0 %v501
    %1235 = vmatprep.subr.mxu0 %v494
    %1236 = vmatpush2.msra.mxu0 %v493
    %1237 = vmatprep.subr.mxu0 %v486
    %1238 = vmatpush2.msra.mxu0 %v485
    %1239 = vmatprep.subr.mxu0 %v478
    %1240 = vmatpush2.msra.mxu0 %v477
    %1241 = vmatprep.subr.mxu0 %v470
    %1242 = vmatpush2.msra.mxu0 %v469
    %1243 = vmatprep.subr.mxu0 %v462
    %1244 = vmatpush2.msra.mxu0 %v461
    %1245 = vmatprep.subr.mxu0 %v454
    %1246 = vmatpush2.msra.mxu0 %v453
    %1247 = vmatprep.mubr.f32.mxu0 %v314
    %1248 = vmatmul.mubr.f32.gmra.mxu0 %v313
    %v1249 = vpop.f32.mrf.mxu0
    %v1250 = vadd.f32 %v854, %v1249
    %v1251 = vpop.f32.mrf.mxu0
    %v1252 = vadd.f32 %v858, %v1251
    %1253 = vmatprep.mubr.f32.mxu0 %v318
    %1254 = vmatmul.mubr.f32.gmra.mxu0 %v317
    %v1255 = vpop.f32.mrf.mxu0
    %v1256 = vadd.f32 %v854, %v1255
    %v1257 = vpop.f32.mrf.mxu0
    %v1258 = vadd.f32 %v858, %v1257
    %1259 = vdwg.mxu0
    %1260 = vmatprep.subr.mxu0 %v702
    %1261 = vmatpush1.msra.mxu0 %v701
    %1262 = vmatprep.subr.mxu0 %v694
    %1263 = vmatpush1.msra.mxu0 %v693
    %1264 = vmatprep.subr.mxu0 %v686
    %1265 = vmatpush1.msra.mxu0 %v685
    %1266 = vmatprep.subr.mxu0 %v678
    %1267 = vmatpush1.msra.mxu0 %v677
    %1268 = vmatprep.subr.mxu0 %v670
    %1269 = vmatpush1.msra.mxu0 %v669
    %1270 = vmatprep.subr.mxu0 %v662
    %1271 = vmatpush1.msra.mxu0 %v661
    %1272 = vmatprep.subr.mxu0 %v654
    %1273 = vmatpush1.msra.mxu0 %v653
    %1274 = vmatprep.subr.mxu0 %v646
    %1275 = vmatpush1.msra.mxu0 %v645
    %1276 = vmatprep.subr.mxu0 %v638
    %1277 = vmatpush1.msra.mxu0 %v637
    %1278 = vmatprep.subr.mxu0 %v630
    %1279 = vmatpush1.msra.mxu0 %v629
    %1280 = vmatprep.subr.mxu0 %v622
    %1281 = vmatpush1.msra.mxu0 %v621
    %1282 = vmatprep.subr.mxu0 %v614
    %1283 = vmatpush1.msra.mxu0 %v613
    %1284 = vmatprep.subr.mxu0 %v606
    %1285 = vmatpush1.msra.mxu0 %v605
    %1286 = vmatprep.subr.mxu0 %v598
    %1287 = vmatpush1.msra.mxu0 %v597
    %1288 = vmatprep.subr.mxu0 %v590
    %1289 = vmatpush1.msra.mxu0 %v589
    %1290 = vmatprep.subr.mxu0 %v582
    %1291 = vmatpush1.msra.mxu0 %v581
    %1292 = vmatprep.subr.mxu0 %v830
    %1293 = vmatpush2.msra.mxu0 %v829
    %1294 = vmatprep.subr.mxu0 %v822
    %1295 = vmatpush2.msra.mxu0 %v821
    %1296 = vmatprep.subr.mxu0 %v814
    %1297 = vmatpush2.msra.mxu0 %v813
    %1298 = vmatprep.subr.mxu0 %v806
    %1299 = vmatpush2.msra.mxu0 %v805
    %1300 = vmatprep.subr.mxu0 %v798
    %1301 = vmatpush2.msra.mxu0 %v797
    %1302 = vmatprep.subr.mxu0 %v790
    %1303 = vmatpush2.msra.mxu0 %v789
    %1304 = vmatprep.subr.mxu0 %v782
    %1305 = vmatpush2.msra.mxu0 %v781
    %1306 = vmatprep.subr.mxu0 %v774
    %1307 = vmatpush2.msra.mxu0 %v773
    %1308 = vmatprep.subr.mxu0 %v766
    %1309 = vmatpush2.msra.mxu0 %v765
    %1310 = vmatprep.subr.mxu0 %v758
    %1311 = vmatpush2.msra.mxu0 %v757
    %1312 = vmatprep.subr.mxu0 %v750
    %1313 = vmatpush2.msra.mxu0 %v749
    %1314 = vmatprep.subr.mxu0 %v742
    %1315 = vmatpush2.msra.mxu0 %v741
    %1316 = vmatprep.subr.mxu0 %v734
    %1317 = vmatpush2.msra.mxu0 %v733
    %1318 = vmatprep.subr.mxu0 %v726
    %1319 = vmatpush2.msra.mxu0 %v725
    %1320 = vmatprep.subr.mxu0 %v718
    %1321 = vmatpush2.msra.mxu0 %v717
    %1322 = vmatprep.subr.mxu0 %v710
    %1323 = vmatpush2.msra.mxu0 %v709
    %1324 = vmatprep.mubr.f32.mxu0 %v316
    %1325 = vmatmul.mubr.f32.gmra.mxu0 %v315
    %v1326 = vpop.f32.mrf.mxu0
    %v1327 = vadd.f32 %v1250, %v1326
    %v1328 = vpop.f32.mrf.mxu0
    %v1329 = vadd.f32 %v1252, %v1328
    %1330 = vmatprep.mubr.f32.mxu0 %v320
    %1331 = vmatmul.mubr.f32.gmra.mxu0 %v319
    %v1332 = vpop.f32.mrf.mxu0
    %v1333 = vadd.f32 %v1256, %v1332
    %v1334 = vpop.f32.mrf.mxu0
    %v1335 = vadd.f32 %v1258, %v1334
    %1336 = vdwg.mxu0
    %1337 = vmatprep.subr.mxu0 %v448
    %1338 = vmatpush1.msra.mxu0 %v447
    %1339 = vmatprep.subr.mxu0 %v440
    %1340 = vmatpush1.msra.mxu0 %v439
    %1341 = vmatprep.subr.mxu0 %v432
    %1342 = vmatpush1.msra.mxu0 %v431
    %1343 = vmatprep.subr.mxu0 %v424
    %1344 = vmatpush1.msra.mxu0 %v423
    %1345 = vmatprep.subr.mxu0 %v416
    %1346 = vmatpush1.msra.mxu0 %v415
    %1347 = vmatprep.subr.mxu0 %v408
    %1348 = vmatpush1.msra.mxu0 %v407
    %1349 = vmatprep.subr.mxu0 %v400
    %1350 = vmatpush1.msra.mxu0 %v399
    %1351 = vmatprep.subr.mxu0 %v392
    %1352 = vmatpush1.msra.mxu0 %v391
    %1353 = vmatprep.subr.mxu0 %v384
    %1354 = vmatpush1.msra.mxu0 %v383
    %1355 = vmatprep.subr.mxu0 %v376
    %1356 = vmatpush1.msra.mxu0 %v375
    %1357 = vmatprep.subr.mxu0 %v368
    %1358 = vmatpush1.msra.mxu0 %v367
    %1359 = vmatprep.subr.mxu0 %v360
    %1360 = vmatpush1.msra.mxu0 %v359
    %1361 = vmatprep.subr.mxu0 %v352
    %1362 = vmatpush1.msra.mxu0 %v351
    %1363 = vmatprep.subr.mxu0 %v344
    %1364 = vmatpush1.msra.mxu0 %v343
    %1365 = vmatprep.subr.mxu0 %v336
    %1366 = vmatpush1.msra.mxu0 %v335
    %1367 = vmatprep.subr.mxu0 %v328
    %1368 = vmatpush1.msra.mxu0 %v327
    %1369 = vmatprep.subr.mxu0 %v576
    %1370 = vmatpush2.msra.mxu0 %v575
    %1371 = vmatprep.subr.mxu0 %v568
    %1372 = vmatpush2.msra.mxu0 %v567
    %1373 = vmatprep.subr.mxu0 %v560
    %1374 = vmatpush2.msra.mxu0 %v559
    %1375 = vmatprep.subr.mxu0 %v552
    %1376 = vmatpush2.msra.mxu0 %v551
    %1377 = vmatprep.subr.mxu0 %v544
    %1378 = vmatpush2.msra.mxu0 %v543
    %1379 = vmatprep.subr.mxu0 %v536
    %1380 = vmatpush2.msra.mxu0 %v535
    %1381 = vmatprep.subr.mxu0 %v528
    %1382 = vmatpush2.msra.mxu0 %v527
    %1383 = vmatprep.subr.mxu0 %v520
    %1384 = vmatpush2.msra.mxu0 %v519
    %1385 = vmatprep.subr.mxu0 %v512
    %1386 = vmatpush2.msra.mxu0 %v511
    %1387 = vmatprep.subr.mxu0 %v504
    %1388 = vmatpush2.msra.mxu0 %v503
    %1389 = vmatprep.subr.mxu0 %v496
    %1390 = vmatpush2.msra.mxu0 %v495
    %1391 = vmatprep.subr.mxu0 %v488
    %1392 = vmatpush2.msra.mxu0 %v487
    %1393 = vmatprep.subr.mxu0 %v480
    %1394 = vmatpush2.msra.mxu0 %v479
    %1395 = vmatprep.subr.mxu0 %v472
    %1396 = vmatpush2.msra.mxu0 %v471
    %1397 = vmatprep.subr.mxu0 %v464
    %1398 = vmatpush2.msra.mxu0 %v463
    %1399 = vmatprep.subr.mxu0 %v456
    %1400 = vmatpush2.msra.mxu0 %v455
    %1401 = vmatprep.mubr.f32.mxu0 %v314
    %1402 = vmatmul.mubr.f32.gmra.mxu0 %v313
    %v1403 = vpop.f32.mrf.mxu0
    %v1404 = vadd.f32 %v862, %v1403
    %v1405 = vpop.f32.mrf.mxu0
    %v1406 = vadd.f32 %v866, %v1405
    %1407 = vmatprep.mubr.f32.mxu0 %v318
    %1408 = vmatmul.mubr.f32.gmra.mxu0 %v317
    %v1409 = vpop.f32.mrf.mxu0
    %v1410 = vadd.f32 %v862, %v1409
    %v1411 = vpop.f32.mrf.mxu0
    %v1412 = vadd.f32 %v866, %v1411
    %1413 = vdwg.mxu0
    %1414 = vmatprep.subr.mxu0 %v704
    %1415 = vmatpush1.msra.mxu0 %v703
    %1416 = vmatprep.subr.mxu0 %v696
    %1417 = vmatpush1.msra.mxu0 %v695
    %1418 = vmatprep.subr.mxu0 %v688
    %1419 = vmatpush1.msra.mxu0 %v687
    %1420 = vmatprep.subr.mxu0 %v680
    %1421 = vmatpush1.msra.mxu0 %v679
    %1422 = vmatprep.subr.mxu0 %v672
    %1423 = vmatpush1.msra.mxu0 %v671
    %1424 = vmatprep.subr.mxu0 %v664
    %1425 = vmatpush1.msra.mxu0 %v663
    %1426 = vmatprep.subr.mxu0 %v656
    %1427 = vmatpush1.msra.mxu0 %v655
    %1428 = vmatprep.subr.mxu0 %v648
    %1429 = vmatpush1.msra.mxu0 %v647
    %1430 = vmatprep.subr.mxu0 %v640
    %1431 = vmatpush1.msra.mxu0 %v639
    %1432 = vmatprep.subr.mxu0 %v632
    %1433 = vmatpush1.msra.mxu0 %v631
    %1434 = vmatprep.subr.mxu0 %v624
    %1435 = vmatpush1.msra.mxu0 %v623
    %1436 = vmatprep.subr.mxu0 %v616
    %1437 = vmatpush1.msra.mxu0 %v615
    %1438 = vmatprep.subr.mxu0 %v608
    %1439 = vmatpush1.msra.mxu0 %v607
    %1440 = vmatprep.subr.mxu0 %v600
    %1441 = vmatpush1.msra.mxu0 %v599
    %1442 = vmatprep.subr.mxu0 %v592
    %1443 = vmatpush1.msra.mxu0 %v591
    %1444 = vmatprep.subr.mxu0 %v584
    %1445 = vmatpush1.msra.mxu0 %v583
    %1446 = vmatprep.subr.mxu0 %v832
    %1447 = vmatpush2.msra.mxu0 %v831
    %1448 = vmatprep.subr.mxu0 %v824
    %1449 = vmatpush2.msra.mxu0 %v823
    %1450 = vmatprep.subr.mxu0 %v816
    %1451 = vmatpush2.msra.mxu0 %v815
    %1452 = vmatprep.subr.mxu0 %v808
    %1453 = vmatpush2.msra.mxu0 %v807
    %1454 = vmatprep.subr.mxu0 %v800
    %1455 = vmatpush2.msra.mxu0 %v799
    %1456 = vmatprep.subr.mxu0 %v792
    %1457 = vmatpush2.msra.mxu0 %v791
    %1458 = vmatprep.subr.mxu0 %v784
    %1459 = vmatpush2.msra.mxu0 %v783
    %1460 = vmatprep.subr.mxu0 %v776
    %1461 = vmatpush2.msra.mxu0 %v775
    %1462 = vmatprep.subr.mxu0 %v768
    %1463 = vmatpush2.msra.mxu0 %v767
    %1464 = vmatprep.subr.mxu0 %v760
    %1465 = vmatpush2.msra.mxu0 %v759
    %1466 = vmatprep.subr.mxu0 %v752
    %1467 = vmatpush2.msra.mxu0 %v751
    %1468 = vmatprep.subr.mxu0 %v744
    %1469 = vmatpush2.msra.mxu0 %v743
    %1470 = vmatprep.subr.mxu0 %v736
    %1471 = vmatpush2.msra.mxu0 %v735
    %1472 = vmatprep.subr.mxu0 %v728
    %1473 = vmatpush2.msra.mxu0 %v727
    %1474 = vmatprep.subr.mxu0 %v720
    %1475 = vmatpush2.msra.mxu0 %v719
    %1476 = vmatprep.subr.mxu0 %v712
    %1477 = vmatpush2.msra.mxu0 %v711
    %1478 = vmatprep.mubr.f32.mxu0 %v316
    %1479 = vmatmul.mubr.f32.gmra.mxu0 %v315
    %v1480 = vpop.f32.mrf.mxu0
    %v1481 = vadd.f32 %v1404, %v1480
    %v1482 = vpop.f32.mrf.mxu0
    %v1483 = vadd.f32 %v1406, %v1482
    %1484 = vmatprep.mubr.f32.mxu0 %v320
    %1485 = vmatmul.mubr.f32.gmra.mxu0 %v319
    %v1486 = vpop.f32.mrf.mxu0
    %v1487 = vadd.f32 %v1410, %v1486
    %v1488 = vpop.f32.mrf.mxu0
    %v1489 = vadd.f32 %v1412, %v1488
    %1490 = vdwg.mxu0
    %v1491 = vmul.f32 %v1019, 0.5
    %v1492 = vmul.f32 %v1021, 0.5
    %v1493 = vmul.f32 %v1173, 0.5
    %v1494 = vmul.f32 %v1175, 0.5
    %v1495 = vmul.f32 %v1327, 0.5
    %v1496 = vmul.f32 %v1329, 0.5
    %v1497 = vmul.f32 %v1481, 0.5
    %v1498 = vmul.f32 %v1483, 0.5
    %v1499 = vmul.f32 %v1025, 0.5
    %v1500 = vmul.f32 %v1027, 0.5
    %v1501 = vmul.f32 %v1179, 0.5
    %v1502 = vmul.f32 %v1181, 0.5
    %v1503 = vmul.f32 %v1333, 0.5
    %v1504 = vmul.f32 %v1335, 0.5
    %v1505 = vmul.f32 %v1487, 0.5
    %v1506 = vmul.f32 %v1489, 0.5
    %v1507 = vtanh.pop %v1491
    %v1508 = vtanh.pop %v1492
    %v1509 = vtanh.pop %v1493
    %v1510 = vtanh.pop %v1494
    %v1511 = vtanh.pop %v1495
    %v1512 = vtanh.pop %v1496
    %v1513 = vtanh.pop %v1497
    %v1514 = vtanh.pop %v1498
    %v1515 = vtanh.pop %v1499
    %v1516 = vtanh.pop %v1500
    %v1517 = vtanh.pop %v1501
    %v1518 = vtanh.pop %v1502
    %v1519 = vtanh.pop %v1503
    %v1520 = vtanh.pop %v1504
    %v1521 = vtanh.pop %v1505
    %v1522 = vtanh.pop %v1506
    %v1523 = vmul.f32 %v1507, 0.5
    %v1524 = vmul.f32 %v1508, 0.5
    %v1525 = vmul.f32 %v1509, 0.5
    %v1526 = vmul.f32 %v1510, 0.5
    %v1527 = vmul.f32 %v1511, 0.5
    %v1528 = vmul.f32 %v1512, 0.5
    %v1529 = vmul.f32 %v1513, 0.5
    %v1530 = vmul.f32 %v1514, 0.5
    %v1531 = vmul.f32 %v1515, 0.5
    %v1532 = vmul.f32 %v1516, 0.5
    %v1533 = vmul.f32 %v1517, 0.5
    %v1534 = vmul.f32 %v1518, 0.5
    %v1535 = vmul.f32 %v1519, 0.5
    %v1536 = vmul.f32 %v1520, 0.5
    %v1537 = vmul.f32 %v1521, 0.5
    %v1538 = vmul.f32 %v1522, 0.5
    %v1539 = vadd.f32 %v1523, 0.5
    %v1540 = vadd.f32 %v1524, 0.5
    %v1541 = vadd.f32 %v1525, 0.5
    %v1542 = vadd.f32 %v1526, 0.5
    %v1543 = vadd.f32 %v1527, 0.5
    %v1544 = vadd.f32 %v1528, 0.5
    %v1545 = vadd.f32 %v1529, 0.5
    %v1546 = vadd.f32 %v1530, 0.5
    %v1547 = vadd.f32 %v1531, 0.5
    %v1548 = vadd.f32 %v1532, 0.5
    %v1549 = vadd.f32 %v1533, 0.5
    %v1550 = vadd.f32 %v1534, 0.5
    %v1551 = vadd.f32 %v1535, 0.5
    %v1552 = vadd.f32 %v1536, 0.5
    %v1553 = vadd.f32 %v1537, 0.5
    %v1554 = vadd.f32 %v1538, 0.5
    %1555 = vst [vmem:[%s5] sm:$0xff] %v1539
    %1556 = vst [vmem:[%s5 + $0x8] sm:$0xff] %v1540
    %1557 = vst [vmem:[%s5 + $0x10] sm:$0xff] %v1541
    %1558 = vst [vmem:[%s5 + $0x18] sm:$0xff] %v1542
    %1559 = vst [vmem:[%s5 + $0x20] sm:$0xff] %v1543
    %1560 = vst [vmem:[%s5 + $0x28] sm:$0xff] %v1544
    %1561 = vst [vmem:[%s5 + $0x30] sm:$0xff] %v1545
    %1562 = vst [vmem:[%s5 + $0x38] sm:$0xff] %v1546
    %1563 = vst [vmem:[%s5 + $0x40] sm:$0x1f] %v1547
    %1564 = vst [vmem:[%s5 + $0x48] sm:$0x1f] %v1548
    %1565 = vst [vmem:[%s5 + $0x50] sm:$0x1f] %v1549
    %1566 = vst [vmem:[%s5 + $0x58] sm:$0x1f] %v1550
    %1567 = vst [vmem:[%s5 + $0x60] sm:$0x1f] %v1551
    %1568 = vst [vmem:[%s5 + $0x68] sm:$0x1f] %v1552
    %1569 = vst [vmem:[%s5 + $0x70] sm:$0x1f] %v1553
    %1570 = vst [vmem:[%s5 + $0x78] sm:$0x1f] %v1554
    // Predicated region
    $region38: #{_decoder_apply.1} parent=1 // pred_check
      _
    $region39: #{_decoder_apply.1} parent=1 // pred_check_branch
      %1572 = sbr.rel (0) target = $region41
    $region40: #{_decoder_apply.1} parent=1 // pred_region
      _
    $region41: #{_decoder_apply.1} parent=1 // pred_fallthru
      _
    // Predicated region
    $region42: #{_decoder_apply.1} parent=1 // pred_check
      _
    $region43: #{_decoder_apply.1} parent=1 // pred_check_branch
      %1574 = sbr.rel (0) target = $region45
    $region44: #{_decoder_apply.1} parent=1 // pred_region
      _
    $region45: #{_decoder_apply.1} parent=1 // pred_fallthru
      _
    %1575 = vsyncpa [#allocation3], 1
    %1576 = vsyncpa [#allocation5], 1
    %1577 = vsyncpa [#allocation8], 1

</llo_original>
